<compile_context>
chip_gen: v7x
topology: tpu7x:2x2x1
jax: 0.10.0
libtpu: 0.0.40
codegen_flags: <defaults>
</compile_context>

<pallas_src>
import numpy as np
import jax
import jax.numpy as jnp
from jax import lax
from jax.experimental import pallas as pl
from jax.experimental.pallas import tpu as pltpu


# ------------------------------- kernel -------------------------------------

def _softmax_rows(s):
    """Row softmax (f32); the divide runs on the EUP via an approximate reciprocal."""
    m = jnp.max(s, axis=-1, keepdims=True)
    e = jnp.exp(s - m)
    return e * pl.reciprocal(jnp.sum(e, axis=-1, keepdims=True), approx=True)


def _make_ssam_kernel(C, N):
    inv_sqrt_n = 1.0 / float(np.sqrt(N))
    bf16 = jnp.bfloat16

    def kernel(x_ref, shift_ref, qkvw_ref, qkvb_ref, wcc_ref, wont_ref,
               colb_ref, bon_ref, out_ref):
        x = x_ref[0]                                   # (C, N) f32, lane-dense
        x_bf = x.astype(bf16)

        # Zero-padded, row-aware neighbour shifts of x via 0/1 matrices on the MXU.
        def shifted(i):
            return jnp.dot(x_bf, shift_ref[i], preferred_element_type=jnp.float32)
        x_wm, x_wp = shifted(0), shifted(1)            # w-1 / w+1 neighbours
        x_hm, x_hp = shifted(2), shifted(3)            # h-1 / h+1 neighbours

        def spatial_branch(idx, xm, xp):
            # depthwise 3-tap conv (per-channel taps/bias are columns of colb)
            t0 = colb_ref[:, 3 * idx + 0: 3 * idx + 1]
            t1 = colb_ref[:, 3 * idx + 1: 3 * idx + 2]
            t2 = colb_ref[:, 3 * idx + 2: 3 * idx + 3]
            cb = colb_ref[:, 6 + idx: 7 + idx]
            y = t0 * xm + t1 * x + t2 * xp + cb                         # (C, N) f32
            # fused Q|K|V projection; 1/sqrt(C) already folded into the Q rows
            qkv = jnp.dot(qkvw_ref[idx], y.astype(bf16),
                          preferred_element_type=jnp.float32)
            qkv = qkv + qkvb_ref[:, idx: idx + 1]                        # (3C, N)
            q = qkv[0 * C:1 * C]
            k = qkv[1 * C:2 * C]
            v = qkv[2 * C:3 * C]
            s = jnp.dot(q.T.astype(bf16), k.astype(bf16),
                        preferred_element_type=jnp.float32)              # (N, N)
            a = _softmax_rows(s)
            # o[c, nq] = sum_nk v[c, nk] * a[nq, nk]   (flash-attention NT form)
            o = lax.dot_general(v.astype(bf16), a.astype(bf16),
                                (((1,), (1,)), ((), ())),
                                preferred_element_type=jnp.float32)      # (C, N)
            # fc_o with gamma pre-folded into weight & bias
            out = jnp.dot(wcc_ref[idx], o.astype(bf16),
                          preferred_element_type=jnp.float32)
            return out + colb_ref[:, 8 + idx: 9 + idx]

        def spectral_branch():
            ysp = jnp.dot(wcc_ref[2], x_bf, preferred_element_type=jnp.float32)
            ysp = ysp + colb_ref[:, 10:11]                               # (C, N)
            ysp_bf = ysp.astype(bf16)
            s = lax.dot_general(ysp_bf, ysp_bf, (((1,), (1,)), ((), ())),
                                preferred_element_type=jnp.float32) * inv_sqrt_n
            a = _softmax_rows(s)                                         # (C, C)
            o = jnp.dot(a.astype(bf16), ysp_bf,
                        preferred_element_type=jnp.float32)              # (C, N)
            out = jnp.dot(o.astype(bf16), wont_ref[...],
                          preferred_element_type=jnp.float32)            # (C, N)
            return out + bon_ref[...]                                    # gamma folded

        br_w = spatial_branch(0, x_wm, x_wp)
        br_h = spatial_branch(1, x_hm, x_hp)
        br_c = spectral_branch()
        # each AttentionModule branch is  gamma*y + x  ->  the sum carries a 3x residual
        attn = br_w + br_h + br_c + 3.0 * x

        # SSAM output projection + residual with the original input
        proj = jnp.dot(wcc_ref[3], attn.astype(bf16),
                       preferred_element_type=jnp.float32)
        out_ref[0] = proj + colb_ref[:, 11:12] + x

    return kernel


# --------------------------- host-side packing ------------------------------

def _shift_matrices(H, W):
    """0/1 matrices S so that (x @ S)[:, m] is a zero-padded shifted neighbour of column m
    of x laid out as (C, N) with n = h*W + w."""
    N = H * W
    r = np.arange(N)[:, None]      # source column n
    c = np.arange(N)[None, :]      # destination column m
    s_wm = (c == r + 1) & (c % W != 0)          # x[:, m-1], zero at w == 0
    s_wp = (r == c + 1) & (c % W != W - 1)      # x[:, m+1], zero at w == W-1
    s_hm = (r == c - W)                         # x[:, m-W], zero at h == 0
    s_hp = (r == c + W)                         # x[:, m+W], zero at h == H-1
    return np.stack([s_wm, s_wp, s_hm, s_hp]).astype(np.float32)


def _pack_params(p, C, H, W):
    """Fold scales/gammas into weights and pack everything into 7 lane-friendly arrays."""
    N = H * W
    f32, bf16 = jnp.float32, jnp.bfloat16
    g = p['gammas']
    inv_sc = 1.0 / float(np.sqrt(C))

    shift_mats = jnp.asarray(_shift_matrices(H, W), dtype=bf16)              # (4, N, N)

    qkv_w = jnp.stack([
        jnp.concatenate([p['fcq_w_w'] * inv_sc, p['fck_w_w'], p['fcv_w_w']], axis=0),
        jnp.concatenate([p['fcq_h_w'] * inv_sc, p['fck_h_w'], p['fcv_h_w']], axis=0),
    ]).astype(bf16)                                                          # (2, 3C, C)

    qkv_b = jnp.stack([
        jnp.concatenate([p['fcq_w_b'] * inv_sc, p['fck_w_b'], p['fcv_w_b']]),
        jnp.concatenate([p['fcq_h_b'] * inv_sc, p['fck_h_b'], p['fcv_h_b']]),
    ], axis=1).astype(f32)                                                   # (3C, 2)

    w_cc = jnp.stack([
        g[0] * p['fco_w_w'],                   # spatial-W fc_o (gamma folded)
        g[1] * p['fco_h_w'],                   # spatial-H fc_o (gamma folded)
        p['pw_w'].reshape(C, C),               # spectral 1x1 conv
        p['proj_w'],                           # SSAM output projection
    ]).astype(bf16)                                                          # (4, C, C)

    wont = (g[2] * p['fco_c_w'].T).astype(bf16)                              # (N, N)

    colb = jnp.concatenate([
        p['conv_w_w'].reshape(C, 3),                                         # cols 0-2
        p['conv_w_h'].reshape(C, 3),                                         # cols 3-5
        jnp.stack([p['conv_b_w'], p['conv_b_h'],                             # cols 6,7
                   g[0] * p['fco_w_b'], g[1] * p['fco_h_b'],                 # cols 8,9
                   p['pw_b'], p['proj_b']], axis=1),                         # cols 10,11
    ], axis=1).astype(f32)                                                   # (C, 12)

    bon = (g[2] * p['fco_c_b']).reshape(1, N).astype(f32)                    # (1, N)

    return [shift_mats, qkv_w, qkv_b, w_cc, wont, colb, bon]


@jax.jit
def ssam_forward(x, params):
    """x: (B, H, W, dim) exactly like the PyTorch SSAM input."""
    B, H, W, C = x.shape
    N = H * W
    x_cn = x.transpose(0, 3, 1, 2).reshape(B, C, N)        # lane-dense (B, C, N)
    plist = _pack_params(params, C, H, W)

    io_spec = pl.BlockSpec((1, C, N), lambda b: (b, 0, 0))

    def _const_spec(a):
        nd = a.ndim
        return pl.BlockSpec(a.shape, lambda b, _nd=nd: (0,) * _nd)

    param_specs = [_const_spec(a) for a in plist]

    out_cn = pl.pallas_call(
        _make_ssam_kernel(C, N),
        out_shape=jax.ShapeDtypeStruct((B, C, N), jnp.float32),
        grid_spec=pltpu.PrefetchScalarGridSpec(
            num_scalar_prefetch=0,
            grid=(B,),
            in_specs=[io_spec] + param_specs,
            out_specs=io_spec,
        ),
        compiler_params=pltpu.CompilerParams(
            dimension_semantics=("parallel",)),
    )(x_cn, *plist)

    return out_cn.reshape(B, C, H, W).transpose(0, 2, 3, 1)


# ------------------------- parameters & reference ---------------------------

def init_params(key, C, H, W):
    N = H * W
    keys = iter(jax.random.split(key, 40))
    nrm = lambda shape, s=0.1: (s * jax.random.normal(next(keys), shape)).astype(jnp.float32)
    p = {}
    p['conv_w_w'] = nrm((C, 1, 1, 3)); p['conv_b_w'] = nrm((C,))   # depthwise (1,3)
    p['conv_w_h'] = nrm((C, 1, 3, 1)); p['conv_b_h'] = nrm((C,))   # depthwise (3,1)
    for br in ('w', 'h'):
        for nm in ('q', 'k', 'v', 'o'):
            p[f'fc{nm}_{br}_w'] = nrm((C, C))
            p[f'fc{nm}_{br}_b'] = nrm((C,))
    p['pw_w'] = nrm((C, C, 1, 1)); p['pw_b'] = nrm((C,))           # 1x1 conv
    p['fco_c_w'] = nrm((N, N)); p['fco_c_b'] = nrm((N,))           # spectral fc_o
    p['proj_w'] = nrm((C, C)); p['proj_b'] = nrm((C,))             # SSAM proj
    # PyTorch inits the three gammas to 0 (attention paths gated off); use nonzero
    # values so the attention math is actually exercised by the check.
    p['gammas'] = jnp.array([0.5, 0.75, 1.25], dtype=jnp.float32)
    return p


def ref_forward(x, p):
    """Pure-JAX f32 mirror of SSAM.forward (eval mode), for verification."""
    B, H, W, C = x.shape
    N = H * W
    xc = jnp.transpose(x, (0, 3, 1, 2))                    # (B, C, H, W)
    scale_c = float(np.sqrt(C))
    scale_n = float(np.sqrt(N))

    def dwconv(z, w, b, pad):
        y = lax.conv_general_dilated(
            z, w, window_strides=(1, 1), padding=pad,
            dimension_numbers=('NCHW', 'OIHW', 'NCHW'), feature_group_count=C)
        return y + b.reshape(1, C, 1, 1)

    def sdpa(t, wq, bq, wk, bk, wv, bv, wo, bo):
        q = t @ wq.T + bq
        k = t @ wk.T + bk
        v = t @ wv.T + bv
        att = jax.nn.softmax(q @ jnp.swapaxes(k, -1, -2) / scale_c, axis=-1)
        return att @ v @ wo.T + bo

    def spatial(cw, cb, pad, wq, bq, wk, bk, wv, bv, wo, bo, gamma):
        y = dwconv(xc, cw, cb, pad)
        t = y.reshape(B, C, N).transpose(0, 2, 1)
        o = sdpa(t, wq, bq, wk, bk, wv, bv, wo, bo)
        return gamma * o.transpose(0, 2, 1).reshape(B, C, H, W) + xc

    def spectral(pw, pb, wo, bo, gamma):
        y = jnp.einsum('oi,bihw->bohw', pw.reshape(C, C), xc) + pb.reshape(1, C, 1, 1)
        t = y.reshape(B, C, N)
        att = jax.nn.softmax(t @ jnp.swapaxes(t, -1, -2) / scale_n, axis=-1)
        o = att @ t @ wo.T + bo
        return gamma * o.reshape(B, C, H, W) + xc

    g = p['gammas']
    attn = (spatial(p['conv_w_w'], p['conv_b_w'], ((0, 0), (1, 1)),
                    p['fcq_w_w'], p['fcq_w_b'], p['fck_w_w'], p['fck_w_b'],
                    p['fcv_w_w'], p['fcv_w_b'], p['fco_w_w'], p['fco_w_b'], g[0])
            + spatial(p['conv_w_h'], p['conv_b_h'], ((1, 1), (0, 0)),
                      p['fcq_h_w'], p['fcq_h_b'], p['fck_h_w'], p['fck_h_b'],
                      p['fcv_h_w'], p['fcv_h_b'], p['fco_h_w'], p['fco_h_b'], g[1])
            + spectral(p['pw_w'], p['pw_b'], p['fco_c_w'], p['fco_c_b'], g[2]))
    c = jnp.transpose(attn, (0, 2, 3, 1))                  # (B, H, W, C)
    return c @ p['proj_w'].T + p['proj_b'] + x


# ----------------------------------- main ------------------------------------

if __name__ == "__main__":
    # SSAM(dim=32, segment_dim=8): input is (B, H, W, dim) with H = W = segment_dim.
    B, C, H, W = 2, 32, 8, 8
    key = jax.random.PRNGKey(0)
    kx, kp = jax.random.split(key)
    x = jax.random.normal(kx, (B, H, W, C), dtype=jnp.float32)
    params = init_params(kp, C, H, W)

    out = ssam_forward(x, params)
    out = jax.block_until_ready(out)
    assert out.shape == (B, H, W, C) and out.dtype == jnp.float32

    ref = np.asarray(ref_forward(x, params))
    got = np.asarray(out)
    max_err = float(np.max(np.abs(got - ref)))
    # bf16 MXU inputs + approximate-reciprocal softmax -> looser tolerance than pure f32.
    if not np.allclose(got, ref, rtol=5e-2, atol=5e-2):
        raise AssertionError(f"kernel/reference mismatch, max abs err={max_err}")
    print("KERNEL_OK")
</pallas_src>

<mosaic_0001>
module attributes {stable_mosaic.version = 11 : i64} {
  func.func @kernel(%arg0: i32, %arg1: memref<1x32x64xf32, #tpu.memory_space<vmem>>, %arg2: memref<4x64x64xbf16, #tpu.memory_space<vmem>>, %arg3: memref<2x96x32xbf16, #tpu.memory_space<vmem>>, %arg4: memref<96x2xf32, #tpu.memory_space<vmem>>, %arg5: memref<4x32x32xbf16, #tpu.memory_space<vmem>>, %arg6: memref<64x64xbf16, #tpu.memory_space<vmem>>, %arg7: memref<32x12xf32, #tpu.memory_space<vmem>>, %arg8: memref<1x64xf32, #tpu.memory_space<vmem>>, %arg9: memref<1x32x64xf32, #tpu.memory_space<vmem>>) attributes {dimension_semantics = [#tpu.dimension_semantics<parallel>], iteration_bounds = array<i64: 2>, scalar_prefetch = 0 : i64, scratch_operands = 0 : i64, tpu.core_type = #tpu.core_type<tc>, window_params = [{transform_indices = @transform_0, window_bounds = array<i64: 1, 32, 64>}, {pipeline_mode = #tpu.pipeline_mode<synchronous>, transform_indices = @transform_1, window_bounds = array<i64: 4, 64, 64>}, {pipeline_mode = #tpu.pipeline_mode<synchronous>, transform_indices = @transform_2, window_bounds = array<i64: 2, 96, 32>}, {pipeline_mode = #tpu.pipeline_mode<synchronous>, transform_indices = @transform_3, window_bounds = array<i64: 96, 2>}, {pipeline_mode = #tpu.pipeline_mode<synchronous>, transform_indices = @transform_4, window_bounds = array<i64: 4, 32, 32>}, {pipeline_mode = #tpu.pipeline_mode<synchronous>, transform_indices = @transform_5, window_bounds = array<i64: 64, 64>}, {pipeline_mode = #tpu.pipeline_mode<synchronous>, transform_indices = @transform_6, window_bounds = array<i64: 32, 12>}, {pipeline_mode = #tpu.pipeline_mode<synchronous>, transform_indices = @transform_7, window_bounds = array<i64: 1, 64>}, {transform_indices = @transform_8, window_bounds = array<i64: 1, 32, 64>}]} {
    %c0 = arith.constant 0 : index
    %c0_0 = arith.constant 0 : index
    %c0_1 = arith.constant 0 : index
    %0 = vector.load %arg1[%c0, %c0_0, %c0_1] : memref<1x32x64xf32, #tpu.memory_space<vmem>>, vector<1x32x64xf32>
    %1 = vector.shape_cast %0 : vector<1x32x64xf32> to vector<32x64xf32>
    %2 = arith.truncf %1 : vector<32x64xf32> to vector<32x64xbf16>
    %c0_2 = arith.constant 0 : index
    %c0_3 = arith.constant 0 : index
    %c0_4 = arith.constant 0 : index
    %3 = vector.load %arg2[%c0_2, %c0_3, %c0_4] : memref<4x64x64xbf16, #tpu.memory_space<vmem>>, vector<1x64x64xbf16>
    %4 = vector.shape_cast %3 : vector<1x64x64xbf16> to vector<64x64xbf16>
    %cst = arith.constant dense<0.000000e+00> : vector<32x64xf32>
    %5 = tpu.matmul %2, %4, %cst {dimension_numbers = #tpu.dot_dimension_numbers<[1], [0], [0], [1], [0, 0, 1, 1], [], []>} : vector<32x64xbf16>, vector<64x64xbf16>, vector<32x64xf32> -> vector<32x64xf32>
    %c1 = arith.constant 1 : index
    %c0_5 = arith.constant 0 : index
    %c0_6 = arith.constant 0 : index
    %6 = vector.load %arg2[%c1, %c0_5, %c0_6] : memref<4x64x64xbf16, #tpu.memory_space<vmem>>, vector<1x64x64xbf16>
    %7 = vector.shape_cast %6 : vector<1x64x64xbf16> to vector<64x64xbf16>
    %cst_7 = arith.constant dense<0.000000e+00> : vector<32x64xf32>
    %8 = tpu.matmul %2, %7, %cst_7 {dimension_numbers = #tpu.dot_dimension_numbers<[1], [0], [0], [1], [0, 0, 1, 1], [], []>} : vector<32x64xbf16>, vector<64x64xbf16>, vector<32x64xf32> -> vector<32x64xf32>
    %c2 = arith.constant 2 : index
    %c0_8 = arith.constant 0 : index
    %c0_9 = arith.constant 0 : index
    %9 = vector.load %arg2[%c2, %c0_8, %c0_9] : memref<4x64x64xbf16, #tpu.memory_space<vmem>>, vector<1x64x64xbf16>
    %10 = vector.shape_cast %9 : vector<1x64x64xbf16> to vector<64x64xbf16>
    %cst_10 = arith.constant dense<0.000000e+00> : vector<32x64xf32>
    %11 = tpu.matmul %2, %10, %cst_10 {dimension_numbers = #tpu.dot_dimension_numbers<[1], [0], [0], [1], [0, 0, 1, 1], [], []>} : vector<32x64xbf16>, vector<64x64xbf16>, vector<32x64xf32> -> vector<32x64xf32>
    %c3 = arith.constant 3 : index
    %c0_11 = arith.constant 0 : index
    %c0_12 = arith.constant 0 : index
    %12 = vector.load %arg2[%c3, %c0_11, %c0_12] : memref<4x64x64xbf16, #tpu.memory_space<vmem>>, vector<1x64x64xbf16>
    %13 = vector.shape_cast %12 : vector<1x64x64xbf16> to vector<64x64xbf16>
    %cst_13 = arith.constant dense<0.000000e+00> : vector<32x64xf32>
    %14 = tpu.matmul %2, %13, %cst_13 {dimension_numbers = #tpu.dot_dimension_numbers<[1], [0], [0], [1], [0, 0, 1, 1], [], []>} : vector<32x64xbf16>, vector<64x64xbf16>, vector<32x64xf32> -> vector<32x64xf32>
    %c0_14 = arith.constant 0 : index
    %c0_15 = arith.constant 0 : index
    %15 = vector.load %arg7[%c0_14, %c0_15] : memref<32x12xf32, #tpu.memory_space<vmem>>, vector<32x1xf32>
    %c0_16 = arith.constant 0 : index
    %c1_17 = arith.constant 1 : index
    %16 = vector.load %arg7[%c0_16, %c1_17] : memref<32x12xf32, #tpu.memory_space<vmem>>, vector<32x1xf32>
    %c0_18 = arith.constant 0 : index
    %c2_19 = arith.constant 2 : index
    %17 = vector.load %arg7[%c0_18, %c2_19] : memref<32x12xf32, #tpu.memory_space<vmem>>, vector<32x1xf32>
    %c0_20 = arith.constant 0 : index
    %c6 = arith.constant 6 : index
    %18 = vector.load %arg7[%c0_20, %c6] : memref<32x12xf32, #tpu.memory_space<vmem>>, vector<32x1xf32>
    %19 = vector.broadcast %15 : vector<32x1xf32> to vector<32x64xf32>
    %20 = arith.mulf %19, %5 : vector<32x64xf32>
    %21 = vector.broadcast %16 : vector<32x1xf32> to vector<32x64xf32>
    %22 = arith.mulf %21, %1 : vector<32x64xf32>
    %23 = arith.addf %20, %22 : vector<32x64xf32>
    %24 = vector.broadcast %17 : vector<32x1xf32> to vector<32x64xf32>
    %25 = arith.mulf %24, %8 : vector<32x64xf32>
    %26 = arith.addf %23, %25 : vector<32x64xf32>
    %27 = vector.broadcast %18 : vector<32x1xf32> to vector<32x64xf32>
    %28 = arith.addf %26, %27 : vector<32x64xf32>
    %c0_21 = arith.constant 0 : index
    %c0_22 = arith.constant 0 : index
    %c0_23 = arith.constant 0 : index
    %29 = vector.load %arg3[%c0_21, %c0_22, %c0_23] : memref<2x96x32xbf16, #tpu.memory_space<vmem>>, vector<1x96x32xbf16>
    %30 = vector.shape_cast %29 : vector<1x96x32xbf16> to vector<96x32xbf16>
    %31 = arith.truncf %28 : vector<32x64xf32> to vector<32x64xbf16>
    %cst_24 = arith.constant dense<0.000000e+00> : vector<96x64xf32>
    %32 = tpu.matmul %30, %31, %cst_24 {dimension_numbers = #tpu.dot_dimension_numbers<[1], [0], [0], [1], [0, 0, 1, 1], [], []>} : vector<96x32xbf16>, vector<32x64xbf16>, vector<96x64xf32> -> vector<96x64xf32>
    %c0_25 = arith.constant 0 : index
    %c0_26 = arith.constant 0 : index
    %33 = vector.load %arg4[%c0_25, %c0_26] : memref<96x2xf32, #tpu.memory_space<vmem>>, vector<96x1xf32>
    %34 = vector.broadcast %33 : vector<96x1xf32> to vector<96x64xf32>
    %35 = arith.addf %32, %34 : vector<96x64xf32>
    %36 = vector.extract_strided_slice %35 {offsets = [0, 0], sizes = [32, 64], strides = [1, 1]} : vector<96x64xf32> to vector<32x64xf32>
    %37 = vector.extract_strided_slice %35 {offsets = [32, 0], sizes = [32, 64], strides = [1, 1]} : vector<96x64xf32> to vector<32x64xf32>
    %38 = vector.extract_strided_slice %35 {offsets = [64, 0], sizes = [32, 64], strides = [1, 1]} : vector<96x64xf32> to vector<32x64xf32>
    %39 = tpu.transpose %36, [1, 0] : vector<32x64xf32> -> vector<64x32xf32>
    %40 = arith.truncf %39 : vector<64x32xf32> to vector<64x32xbf16>
    %41 = arith.truncf %37 : vector<32x64xf32> to vector<32x64xbf16>
    %cst_27 = arith.constant dense<0.000000e+00> : vector<64x64xf32>
    %42 = tpu.matmul %40, %41, %cst_27 {dimension_numbers = #tpu.dot_dimension_numbers<[1], [0], [0], [1], [0, 0, 1, 1], [], []>} : vector<64x32xbf16>, vector<32x64xbf16>, vector<64x64xf32> -> vector<64x64xf32>
    %cst_28 = arith.constant dense<0xFF800000> : vector<64xf32>
    %43 = vector.multi_reduction <maximumf>, %42, %cst_28 [1] : vector<64x64xf32> to vector<64xf32>
    %44 = vector.shape_cast %43 : vector<64xf32> to vector<64x1xf32>
    %45 = vector.broadcast %44 : vector<64x1xf32> to vector<64x64xf32>
    %46 = arith.subf %42, %45 : vector<64x64xf32>
    %47 = math.exp %46 : vector<64x64xf32>
    %cst_29 = arith.constant dense<0.000000e+00> : vector<64xf32>
    %48 = vector.multi_reduction <add>, %47, %cst_29 [1] : vector<64x64xf32> to vector<64xf32>
    %49 = vector.shape_cast %48 : vector<64xf32> to vector<64x1xf32>
    %50 = tpu.reciprocal %49 {approx = true} : vector<64x1xf32> -> vector<64x1xf32>
    %51 = vector.broadcast %50 : vector<64x1xf32> to vector<64x64xf32>
    %52 = arith.mulf %47, %51 : vector<64x64xf32>
    %53 = arith.truncf %38 : vector<32x64xf32> to vector<32x64xbf16>
    %54 = arith.truncf %52 : vector<64x64xf32> to vector<64x64xbf16>
    %cst_30 = arith.constant dense<0.000000e+00> : vector<32x64xf32>
    %55 = tpu.matmul %53, %54, %cst_30 {dimension_numbers = #tpu.dot_dimension_numbers<[1], [1], [0], [0], [0, 0, 1, 0], [], []>} : vector<32x64xbf16>, vector<64x64xbf16>, vector<32x64xf32> -> vector<32x64xf32>
    %c0_31 = arith.constant 0 : index
    %c0_32 = arith.constant 0 : index
    %c0_33 = arith.constant 0 : index
    %56 = vector.load %arg5[%c0_31, %c0_32, %c0_33] : memref<4x32x32xbf16, #tpu.memory_space<vmem>>, vector<1x32x32xbf16>
    %57 = vector.shape_cast %56 : vector<1x32x32xbf16> to vector<32x32xbf16>
    %58 = arith.truncf %55 : vector<32x64xf32> to vector<32x64xbf16>
    %cst_34 = arith.constant dense<0.000000e+00> : vector<32x64xf32>
    %59 = tpu.matmul %57, %58, %cst_34 {dimension_numbers = #tpu.dot_dimension_numbers<[1], [0], [0], [1], [0, 0, 1, 1], [], []>} : vector<32x32xbf16>, vector<32x64xbf16>, vector<32x64xf32> -> vector<32x64xf32>
    %c0_35 = arith.constant 0 : index
    %c8 = arith.constant 8 : index
    %60 = vector.load %arg7[%c0_35, %c8] : memref<32x12xf32, #tpu.memory_space<vmem>>, vector<32x1xf32>
    %61 = vector.broadcast %60 : vector<32x1xf32> to vector<32x64xf32>
    %62 = arith.addf %59, %61 : vector<32x64xf32>
    %c0_36 = arith.constant 0 : index
    %c3_37 = arith.constant 3 : index
    %63 = vector.load %arg7[%c0_36, %c3_37] : memref<32x12xf32, #tpu.memory_space<vmem>>, vector<32x1xf32>
    %c0_38 = arith.constant 0 : index
    %c4 = arith.constant 4 : index
    %64 = vector.load %arg7[%c0_38, %c4] : memref<32x12xf32, #tpu.memory_space<vmem>>, vector<32x1xf32>
    %c0_39 = arith.constant 0 : index
    %c5 = arith.constant 5 : index
    %65 = vector.load %arg7[%c0_39, %c5] : memref<32x12xf32, #tpu.memory_space<vmem>>, vector<32x1xf32>
    %c0_40 = arith.constant 0 : index
    %c7 = arith.constant 7 : index
    %66 = vector.load %arg7[%c0_40, %c7] : memref<32x12xf32, #tpu.memory_space<vmem>>, vector<32x1xf32>
    %67 = vector.broadcast %63 : vector<32x1xf32> to vector<32x64xf32>
    %68 = arith.mulf %67, %11 : vector<32x64xf32>
    %69 = vector.broadcast %64 : vector<32x1xf32> to vector<32x64xf32>
    %70 = arith.mulf %69, %1 : vector<32x64xf32>
    %71 = arith.addf %68, %70 : vector<32x64xf32>
    %72 = vector.broadcast %65 : vector<32x1xf32> to vector<32x64xf32>
    %73 = arith.mulf %72, %14 : vector<32x64xf32>
    %74 = arith.addf %71, %73 : vector<32x64xf32>
    %75 = vector.broadcast %66 : vector<32x1xf32> to vector<32x64xf32>
    %76 = arith.addf %74, %75 : vector<32x64xf32>
    %c1_41 = arith.constant 1 : index
    %c0_42 = arith.constant 0 : index
    %c0_43 = arith.constant 0 : index
    %77 = vector.load %arg3[%c1_41, %c0_42, %c0_43] : memref<2x96x32xbf16, #tpu.memory_space<vmem>>, vector<1x96x32xbf16>
    %78 = vector.shape_cast %77 : vector<1x96x32xbf16> to vector<96x32xbf16>
    %79 = arith.truncf %76 : vector<32x64xf32> to vector<32x64xbf16>
    %cst_44 = arith.constant dense<0.000000e+00> : vector<96x64xf32>
    %80 = tpu.matmul %78, %79, %cst_44 {dimension_numbers = #tpu.dot_dimension_numbers<[1], [0], [0], [1], [0, 0, 1, 1], [], []>} : vector<96x32xbf16>, vector<32x64xbf16>, vector<96x64xf32> -> vector<96x64xf32>
    %c0_45 = arith.constant 0 : index
    %c1_46 = arith.constant 1 : index
    %81 = vector.load %arg4[%c0_45, %c1_46] : memref<96x2xf32, #tpu.memory_space<vmem>>, vector<96x1xf32>
    %82 = vector.broadcast %81 : vector<96x1xf32> to vector<96x64xf32>
    %83 = arith.addf %80, %82 : vector<96x64xf32>
    %84 = vector.extract_strided_slice %83 {offsets = [0, 0], sizes = [32, 64], strides = [1, 1]} : vector<96x64xf32> to vector<32x64xf32>
    %85 = vector.extract_strided_slice %83 {offsets = [32, 0], sizes = [32, 64], strides = [1, 1]} : vector<96x64xf32> to vector<32x64xf32>
    %86 = vector.extract_strided_slice %83 {offsets = [64, 0], sizes = [32, 64], strides = [1, 1]} : vector<96x64xf32> to vector<32x64xf32>
    %87 = tpu.transpose %84, [1, 0] : vector<32x64xf32> -> vector<64x32xf32>
    %88 = arith.truncf %87 : vector<64x32xf32> to vector<64x32xbf16>
    %89 = arith.truncf %85 : vector<32x64xf32> to vector<32x64xbf16>
    %cst_47 = arith.constant dense<0.000000e+00> : vector<64x64xf32>
    %90 = tpu.matmul %88, %89, %cst_47 {dimension_numbers = #tpu.dot_dimension_numbers<[1], [0], [0], [1], [0, 0, 1, 1], [], []>} : vector<64x32xbf16>, vector<32x64xbf16>, vector<64x64xf32> -> vector<64x64xf32>
    %cst_48 = arith.constant dense<0xFF800000> : vector<64xf32>
    %91 = vector.multi_reduction <maximumf>, %90, %cst_48 [1] : vector<64x64xf32> to vector<64xf32>
    %92 = vector.shape_cast %91 : vector<64xf32> to vector<64x1xf32>
    %93 = vector.broadcast %92 : vector<64x1xf32> to vector<64x64xf32>
    %94 = arith.subf %90, %93 : vector<64x64xf32>
    %95 = math.exp %94 : vector<64x64xf32>
    %cst_49 = arith.constant dense<0.000000e+00> : vector<64xf32>
    %96 = vector.multi_reduction <add>, %95, %cst_49 [1] : vector<64x64xf32> to vector<64xf32>
    %97 = vector.shape_cast %96 : vector<64xf32> to vector<64x1xf32>
    %98 = tpu.reciprocal %97 {approx = true} : vector<64x1xf32> -> vector<64x1xf32>
    %99 = vector.broadcast %98 : vector<64x1xf32> to vector<64x64xf32>
    %100 = arith.mulf %95, %99 : vector<64x64xf32>
    %101 = arith.truncf %86 : vector<32x64xf32> to vector<32x64xbf16>
    %102 = arith.truncf %100 : vector<64x64xf32> to vector<64x64xbf16>
    %cst_50 = arith.constant dense<0.000000e+00> : vector<32x64xf32>
    %103 = tpu.matmul %101, %102, %cst_50 {dimension_numbers = #tpu.dot_dimension_numbers<[1], [1], [0], [0], [0, 0, 1, 0], [], []>} : vector<32x64xbf16>, vector<64x64xbf16>, vector<32x64xf32> -> vector<32x64xf32>
    %c1_51 = arith.constant 1 : index
    %c0_52 = arith.constant 0 : index
    %c0_53 = arith.constant 0 : index
    %104 = vector.load %arg5[%c1_51, %c0_52, %c0_53] : memref<4x32x32xbf16, #tpu.memory_space<vmem>>, vector<1x32x32xbf16>
    %105 = vector.shape_cast %104 : vector<1x32x32xbf16> to vector<32x32xbf16>
    %106 = arith.truncf %103 : vector<32x64xf32> to vector<32x64xbf16>
    %cst_54 = arith.constant dense<0.000000e+00> : vector<32x64xf32>
    %107 = tpu.matmul %105, %106, %cst_54 {dimension_numbers = #tpu.dot_dimension_numbers<[1], [0], [0], [1], [0, 0, 1, 1], [], []>} : vector<32x32xbf16>, vector<32x64xbf16>, vector<32x64xf32> -> vector<32x64xf32>
    %c0_55 = arith.constant 0 : index
    %c9 = arith.constant 9 : index
    %108 = vector.load %arg7[%c0_55, %c9] : memref<32x12xf32, #tpu.memory_space<vmem>>, vector<32x1xf32>
    %109 = vector.broadcast %108 : vector<32x1xf32> to vector<32x64xf32>
    %110 = arith.addf %107, %109 : vector<32x64xf32>
    %c2_56 = arith.constant 2 : index
    %c0_57 = arith.constant 0 : index
    %c0_58 = arith.constant 0 : index
    %111 = vector.load %arg5[%c2_56, %c0_57, %c0_58] : memref<4x32x32xbf16, #tpu.memory_space<vmem>>, vector<1x32x32xbf16>
    %112 = vector.shape_cast %111 : vector<1x32x32xbf16> to vector<32x32xbf16>
    %cst_59 = arith.constant dense<0.000000e+00> : vector<32x64xf32>
    %113 = tpu.matmul %112, %2, %cst_59 {dimension_numbers = #tpu.dot_dimension_numbers<[1], [0], [0], [1], [0, 0, 1, 1], [], []>} : vector<32x32xbf16>, vector<32x64xbf16>, vector<32x64xf32> -> vector<32x64xf32>
    %c0_60 = arith.constant 0 : index
    %c10 = arith.constant 10 : index
    %114 = vector.load %arg7[%c0_60, %c10] : memref<32x12xf32, #tpu.memory_space<vmem>>, vector<32x1xf32>
    %115 = vector.broadcast %114 : vector<32x1xf32> to vector<32x64xf32>
    %116 = arith.addf %113, %115 : vector<32x64xf32>
    %117 = arith.truncf %116 : vector<32x64xf32> to vector<32x64xbf16>
    %cst_61 = arith.constant dense<0.000000e+00> : vector<32x32xf32>
    %118 = tpu.matmul %117, %117, %cst_61 {dimension_numbers = #tpu.dot_dimension_numbers<[1], [1], [0], [0], [0, 0, 1, 0], [], []>} : vector<32x64xbf16>, vector<32x64xbf16>, vector<32x32xf32> -> vector<32x32xf32>
    %cst_62 = arith.constant 1.250000e-01 : f32
    %119 = vector.broadcast %cst_62 : f32 to vector<32x32xf32>
    %120 = arith.mulf %118, %119 : vector<32x32xf32>
    %cst_63 = arith.constant dense<0xFF800000> : vector<32xf32>
    %121 = vector.multi_reduction <maximumf>, %120, %cst_63 [1] : vector<32x32xf32> to vector<32xf32>
    %122 = vector.shape_cast %121 : vector<32xf32> to vector<32x1xf32>
    %123 = vector.broadcast %122 : vector<32x1xf32> to vector<32x32xf32>
    %124 = arith.subf %120, %123 : vector<32x32xf32>
    %125 = math.exp %124 : vector<32x32xf32>
    %cst_64 = arith.constant dense<0.000000e+00> : vector<32xf32>
    %126 = vector.multi_reduction <add>, %125, %cst_64 [1] : vector<32x32xf32> to vector<32xf32>
    %127 = vector.shape_cast %126 : vector<32xf32> to vector<32x1xf32>
    %128 = tpu.reciprocal %127 {approx = true} : vector<32x1xf32> -> vector<32x1xf32>
    %129 = vector.broadcast %128 : vector<32x1xf32> to vector<32x32xf32>
    %130 = arith.mulf %125, %129 : vector<32x32xf32>
    %131 = arith.truncf %130 : vector<32x32xf32> to vector<32x32xbf16>
    %cst_65 = arith.constant dense<0.000000e+00> : vector<32x64xf32>
    %132 = tpu.matmul %131, %117, %cst_65 {dimension_numbers = #tpu.dot_dimension_numbers<[1], [0], [0], [1], [0, 0, 1, 1], [], []>} : vector<32x32xbf16>, vector<32x64xbf16>, vector<32x64xf32> -> vector<32x64xf32>
    %133 = arith.truncf %132 : vector<32x64xf32> to vector<32x64xbf16>
    %c0_66 = arith.constant 0 : index
    %c0_67 = arith.constant 0 : index
    %134 = vector.load %arg6[%c0_66, %c0_67] : memref<64x64xbf16, #tpu.memory_space<vmem>>, vector<64x64xbf16>
    %cst_68 = arith.constant dense<0.000000e+00> : vector<32x64xf32>
    %135 = tpu.matmul %133, %134, %cst_68 {dimension_numbers = #tpu.dot_dimension_numbers<[1], [0], [0], [1], [0, 0, 1, 1], [], []>} : vector<32x64xbf16>, vector<64x64xbf16>, vector<32x64xf32> -> vector<32x64xf32>
    %c0_69 = arith.constant 0 : index
    %c0_70 = arith.constant 0 : index
    %136 = vector.load %arg8[%c0_69, %c0_70] : memref<1x64xf32, #tpu.memory_space<vmem>>, vector<1x64xf32>
    %137 = vector.broadcast %136 : vector<1x64xf32> to vector<32x64xf32>
    %138 = arith.addf %135, %137 : vector<32x64xf32>
    %139 = arith.addf %62, %110 : vector<32x64xf32>
    %140 = arith.addf %139, %138 : vector<32x64xf32>
    %cst_71 = arith.constant 3.000000e+00 : f32
    %141 = vector.broadcast %cst_71 : f32 to vector<32x64xf32>
    %142 = arith.mulf %141, %1 : vector<32x64xf32>
    %143 = arith.addf %140, %142 : vector<32x64xf32>
    %c3_72 = arith.constant 3 : index
    %c0_73 = arith.constant 0 : index
    %c0_74 = arith.constant 0 : index
    %144 = vector.load %arg5[%c3_72, %c0_73, %c0_74] : memref<4x32x32xbf16, #tpu.memory_space<vmem>>, vector<1x32x32xbf16>
    %145 = vector.shape_cast %144 : vector<1x32x32xbf16> to vector<32x32xbf16>
    %146 = arith.truncf %143 : vector<32x64xf32> to vector<32x64xbf16>
    %cst_75 = arith.constant dense<0.000000e+00> : vector<32x64xf32>
    %147 = tpu.matmul %145, %146, %cst_75 {dimension_numbers = #tpu.dot_dimension_numbers<[1], [0], [0], [1], [0, 0, 1, 1], [], []>} : vector<32x32xbf16>, vector<32x64xbf16>, vector<32x64xf32> -> vector<32x64xf32>
    %c0_76 = arith.constant 0 : index
    %c11 = arith.constant 11 : index
    %148 = vector.load %arg7[%c0_76, %c11] : memref<32x12xf32, #tpu.memory_space<vmem>>, vector<32x1xf32>
    %149 = vector.broadcast %148 : vector<32x1xf32> to vector<32x64xf32>
    %150 = arith.addf %147, %149 : vector<32x64xf32>
    %151 = arith.addf %150, %1 : vector<32x64xf32>
    %c0_77 = arith.constant 0 : index
    %c0_78 = arith.constant 0 : index
    %c0_79 = arith.constant 0 : index
    %152 = vector.load %arg9[%c0_77, %c0_78, %c0_79] : memref<1x32x64xf32, #tpu.memory_space<vmem>>, vector<1x32x64xf32>
    %153 = vector.shape_cast %152 : vector<1x32x64xf32> to vector<32x64xf32>
    %154 = vector.shape_cast %151 : vector<32x64xf32> to vector<1x32x64xf32>
    tpu.vector_store %arg9[%c0_77, %c0_78, %c0_79], %154 {strides = array<i32>} : memref<1x32x64xf32, #tpu.memory_space<vmem>>, vector<1x32x64xf32>,
    return
  }
  func.func @transform_0(%arg0: i32) -> (i32, i32, i32) {
    %c0_i32 = arith.constant 0 : i32
    %c0_i32_0 = arith.constant 0 : i32
    %c0_i32_1 = arith.constant 0 : i32
    return %arg0, %c0_i32, %c0_i32_0 : i32, i32, i32
  }
  func.func @transform_1(%arg0: i32) -> (i32, i32, i32) {
    %c0_i32 = arith.constant 0 : i32
    %c0_i32_0 = arith.constant 0 : i32
    %c0_i32_1 = arith.constant 0 : i32
    %c0_i32_2 = arith.constant 0 : i32
    return %c0_i32, %c0_i32_0, %c0_i32_1 : i32, i32, i32
  }
  func.func @transform_2(%arg0: i32) -> (i32, i32, i32) {
    %c0_i32 = arith.constant 0 : i32
    %c0_i32_0 = arith.constant 0 : i32
    %c0_i32_1 = arith.constant 0 : i32
    %c0_i32_2 = arith.constant 0 : i32
    return %c0_i32, %c0_i32_0, %c0_i32_1 : i32, i32, i32
  }
  func.func @transform_3(%arg0: i32) -> (i32, i32) {
    %c0_i32 = arith.constant 0 : i32
    %c0_i32_0 = arith.constant 0 : i32
    %c0_i32_1 = arith.constant 0 : i32
    return %c0_i32, %c0_i32_0 : i32, i32
  }
  func.func @transform_4(%arg0: i32) -> (i32, i32, i32) {
    %c0_i32 = arith.constant 0 : i32
    %c0_i32_0 = arith.constant 0 : i32
    %c0_i32_1 = arith.constant 0 : i32
    %c0_i32_2 = arith.constant 0 : i32
    return %c0_i32, %c0_i32_0, %c0_i32_1 : i32, i32, i32
  }
  func.func @transform_5(%arg0: i32) -> (i32, i32) {
    %c0_i32 = arith.constant 0 : i32
    %c0_i32_0 = arith.constant 0 : i32
    %c0_i32_1 = arith.constant 0 : i32
    return %c0_i32, %c0_i32_0 : i32, i32
  }
  func.func @transform_6(%arg0: i32) -> (i32, i32) {
    %c0_i32 = arith.constant 0 : i32
    %c0_i32_0 = arith.constant 0 : i32
    %c0_i32_1 = arith.constant 0 : i32
    return %c0_i32, %c0_i32_0 : i32, i32
  }
  func.func @transform_7(%arg0: i32) -> (i32, i32) {
    %c0_i32 = arith.constant 0 : i32
    %c0_i32_0 = arith.constant 0 : i32
    %c0_i32_1 = arith.constant 0 : i32
    return %c0_i32, %c0_i32_0 : i32, i32
  }
  func.func @transform_8(%arg0: i32) -> (i32, i32, i32) {
    %c0_i32 = arith.constant 0 : i32
    %c0_i32_0 = arith.constant 0 : i32
    %c0_i32_1 = arith.constant 0 : i32
    return %arg0, %c0_i32, %c0_i32_0 : i32, i32, i32
  }
}

</mosaic_0001>

<llo_original>
// kernel: ssam_forward.1
$region0: #{ssam_forward.1}
  #allocation0 [shape = 'u32[]', space=smem, size = 0x4, offset = 0x4, fixed_abs, tag = 'smem constant byte address 0x4 - core index']
  #allocation1 [shape = 'u32[144,128]{1,0:T(1,128)}', space=vmem, size = 0x12000, scoped, tag = 'internal scratch']
  %s0 = inlined_call_operand.vmem [shape: f32[2,32,64], index: 0, kind: input, shape index: {}]
  %s1 = inlined_call_operand.vmem [shape: bf16[4,64,64], index: 1, kind: input, shape index: {}]
  %s2 = inlined_call_operand.vmem [shape: bf16[2,96,32], index: 2, kind: input, shape index: {}]
  %s3 = inlined_call_operand.vmem [shape: f32[96,2], index: 3, kind: input, shape index: {}]
  %s4 = inlined_call_operand.vmem [shape: bf16[4,32,32], index: 4, kind: input, shape index: {}]
  %s5 = inlined_call_operand.vmem [shape: bf16[64,64], index: 5, kind: input, shape index: {}]
  %s6 = inlined_call_operand.vmem [shape: f32[32,12], index: 6, kind: input, shape index: {}]
  %s7 = inlined_call_operand.vmem [shape: f32[1,64], index: 7, kind: input, shape index: {}]
  %s8 = inlined_call_operand.vmem [shape: f32[2,32,64], index: 8, kind: output, shape index: {}]
  %s9 = sld [smem:[#allocation0]]
  $region65: #{ssam_forward.1} parent=0
    _
  %s11 = ssub.s32 1, %s9
  %s12 = scalar_select 0, %s11, %s9
  loop: start=0, step=1, limit=4
  $region2: #{ssam_forward.1} parent=0 // loop_pre_header
    _
  $region3: #{ssam_forward.1} parent=0 // loop_header
    %s14 = sphi 0, %s18
    %p15 = scmp.ge.s32.totalorder %s14, 4
    %s24 = sphi 0, %s26
    %s27 = sphi 0, %s24
    %s28 = sphi 0, %s27
    %s44 = sphi 0, %s28
    %s48 = sphi 0, %s48
    %s50 = sphi 0, %s48
    %s51 = sphi 0, %s50
    %s65 = sphi 0, %s51
    %s69 = sphi 0, %s69
    %s71 = sphi 0, %s69
    %s72 = sphi 0, %s71
    %s86 = sphi 0, %s72
    %s90 = sphi 0, %s90
    %s92 = sphi 0, %s90
    %s93 = sphi 0, %s92
    %s107 = sphi 0, %s93
    %s111 = sphi 0, %s111
    %s113 = sphi 0, %s111
    %s114 = sphi 0, %s113
    %s128 = sphi 0, %s114
    %s132 = sphi 0, %s132
    %s134 = sphi 0, %s132
    %s135 = sphi 0, %s134
    %s149 = sphi 0, %s135
    %s153 = sphi 0, %s153
    %s155 = sphi 0, %s153
    %s156 = sphi 0, %s155
    %s170 = sphi 0, %s156
    %s174 = sphi 0, %s174
    %s176 = sphi 0, %s174
    %s177 = sphi 0, %s176
    %s191 = sphi 0, %s177
    %s197 = sphi 0, %s199
    %s200 = sphi 0, %s197
    %s201 = sphi 0, %s200
    %s217 = sphi 0, %s201
  $region4: #{ssam_forward.1} parent=0 // loop_header_branch
    %17 = sbr.rel (%p15) target = $region8
  $region5: #{ssam_forward.1} parent=0 // loop_body
    %s19 = ssub.s32 %s14, 1
    %s20 = ssub.s32 %s14, 2
    %s21 = sadd.s32 %s14, 1
    %s22 = ssub.s32 %s14, %s21
    %p23 = scmp.eq.s32.totalorder %s22, 0
    %s25 = sadd.s32 %s24, 1
    %s26 = scalar_select %p23, %s24, %s25
    %p29 = pneg %p23
    %p30 = scmp.eq.s32.totalorder %s14, 1
    %p31 = por %p29, %p30
    %p32 = scmp.ne.s32.totalorder %s24, %s27
    %p33 = scmp.eq.s32.totalorder %s14, 0
    %p34 = por %p32, %p33
    %p35 = scmp.ne.s32.totalorder %s24, %s27
    %p36 = scmp.eq.s32.totalorder %s19, 1
    %p37 = por %p35, %p36
    %p38 = scmp.ne.s32.totalorder %s27, %s28
    %p39 = scmp.eq.s32.totalorder %s19, 0
    %p40 = por %p38, %p39
    %p41 = scmp.ne.s32.totalorder %s27, %s28
    %p42 = scmp.eq.s32.totalorder %s20, 1
    %p43 = por %p41, %p42
    %p45 = scmp.ne.s32.totalorder %s28, %s44
    %p46 = scmp.eq.s32.totalorder %s20, 0
    %p47 = por %p45, %p46
    %s49 = sadd.s32 %s48, 1
    %p52 = scmp.eq.s32.totalorder %s14, 1
    %p53 = scmp.ne.s32.totalorder %s48, %s50
    %p54 = scmp.eq.s32.totalorder %s14, 0
    %p55 = por %p53, %p54
    %p56 = scmp.ne.s32.totalorder %s48, %s50
    %p57 = scmp.eq.s32.totalorder %s19, 1
    %p58 = por %p56, %p57
    %p59 = scmp.ne.s32.totalorder %s50, %s51
    %p60 = scmp.eq.s32.totalorder %s19, 0
    %p61 = por %p59, %p60
    %p62 = scmp.ne.s32.totalorder %s50, %s51
    %p63 = scmp.eq.s32.totalorder %s20, 1
    %p64 = por %p62, %p63
    %p66 = scmp.ne.s32.totalorder %s51, %s65
    %p67 = scmp.eq.s32.totalorder %s20, 0
    %p68 = por %p66, %p67
    %s70 = sadd.s32 %s69, 1
    %p73 = scmp.eq.s32.totalorder %s14, 1
    %p74 = scmp.ne.s32.totalorder %s69, %s71
    %p75 = scmp.eq.s32.totalorder %s14, 0
    %p76 = por %p74, %p75
    %p77 = scmp.ne.s32.totalorder %s69, %s71
    %p78 = scmp.eq.s32.totalorder %s19, 1
    %p79 = por %p77, %p78
    %p80 = scmp.ne.s32.totalorder %s71, %s72
    %p81 = scmp.eq.s32.totalorder %s19, 0
    %p82 = por %p80, %p81
    %p83 = scmp.ne.s32.totalorder %s71, %s72
    %p84 = scmp.eq.s32.totalorder %s20, 1
    %p85 = por %p83, %p84
    %p87 = scmp.ne.s32.totalorder %s72, %s86
    %p88 = scmp.eq.s32.totalorder %s20, 0
    %p89 = por %p87, %p88
    %s91 = sadd.s32 %s90, 1
    %p94 = scmp.eq.s32.totalorder %s14, 1
    %p95 = scmp.ne.s32.totalorder %s90, %s92
    %p96 = scmp.eq.s32.totalorder %s14, 0
    %p97 = por %p95, %p96
    %p98 = scmp.ne.s32.totalorder %s90, %s92
    %p99 = scmp.eq.s32.totalorder %s19, 1
    %p100 = por %p98, %p99
    %p101 = scmp.ne.s32.totalorder %s92, %s93
    %p102 = scmp.eq.s32.totalorder %s19, 0
    %p103 = por %p101, %p102
    %p104 = scmp.ne.s32.totalorder %s92, %s93
    %p105 = scmp.eq.s32.totalorder %s20, 1
    %p106 = por %p104, %p105
    %p108 = scmp.ne.s32.totalorder %s93, %s107
    %p109 = scmp.eq.s32.totalorder %s20, 0
    %p110 = por %p108, %p109
    %s112 = sadd.s32 %s111, 1
    %p115 = scmp.eq.s32.totalorder %s14, 1
    %p116 = scmp.ne.s32.totalorder %s111, %s113
    %p117 = scmp.eq.s32.totalorder %s14, 0
    %p118 = por %p116, %p117
    %p119 = scmp.ne.s32.totalorder %s111, %s113
    %p120 = scmp.eq.s32.totalorder %s19, 1
    %p121 = por %p119, %p120
    %p122 = scmp.ne.s32.totalorder %s113, %s114
    %p123 = scmp.eq.s32.totalorder %s19, 0
    %p124 = por %p122, %p123
    %p125 = scmp.ne.s32.totalorder %s113, %s114
    %p126 = scmp.eq.s32.totalorder %s20, 1
    %p127 = por %p125, %p126
    %p129 = scmp.ne.s32.totalorder %s114, %s128
    %p130 = scmp.eq.s32.totalorder %s20, 0
    %p131 = por %p129, %p130
    %s133 = sadd.s32 %s132, 1
    %p136 = scmp.eq.s32.totalorder %s14, 1
    %p137 = scmp.ne.s32.totalorder %s132, %s134
    %p138 = scmp.eq.s32.totalorder %s14, 0
    %p139 = por %p137, %p138
    %p140 = scmp.ne.s32.totalorder %s132, %s134
    %p141 = scmp.eq.s32.totalorder %s19, 1
    %p142 = por %p140, %p141
    %p143 = scmp.ne.s32.totalorder %s134, %s135
    %p144 = scmp.eq.s32.totalorder %s19, 0
    %p145 = por %p143, %p144
    %p146 = scmp.ne.s32.totalorder %s134, %s135
    %p147 = scmp.eq.s32.totalorder %s20, 1
    %p148 = por %p146, %p147
    %p150 = scmp.ne.s32.totalorder %s135, %s149
    %p151 = scmp.eq.s32.totalorder %s20, 0
    %p152 = por %p150, %p151
    %s154 = sadd.s32 %s153, 1
    %p157 = scmp.eq.s32.totalorder %s14, 1
    %p158 = scmp.ne.s32.totalorder %s153, %s155
    %p159 = scmp.eq.s32.totalorder %s14, 0
    %p160 = por %p158, %p159
    %p161 = scmp.ne.s32.totalorder %s153, %s155
    %p162 = scmp.eq.s32.totalorder %s19, 1
    %p163 = por %p161, %p162
    %p164 = scmp.ne.s32.totalorder %s155, %s156
    %p165 = scmp.eq.s32.totalorder %s19, 0
    %p166 = por %p164, %p165
    %p167 = scmp.ne.s32.totalorder %s155, %s156
    %p168 = scmp.eq.s32.totalorder %s20, 1
    %p169 = por %p167, %p168
    %p171 = scmp.ne.s32.totalorder %s156, %s170
    %p172 = scmp.eq.s32.totalorder %s20, 0
    %p173 = por %p171, %p172
    %s175 = sadd.s32 %s174, 1
    %p178 = scmp.eq.s32.totalorder %s14, 1
    %p179 = scmp.ne.s32.totalorder %s174, %s176
    %p180 = scmp.eq.s32.totalorder %s14, 0
    %p181 = por %p179, %p180
    %p182 = scmp.ne.s32.totalorder %s174, %s176
    %p183 = scmp.eq.s32.totalorder %s19, 1
    %p184 = por %p182, %p183
    %p185 = scmp.ne.s32.totalorder %s176, %s177
    %p186 = scmp.eq.s32.totalorder %s19, 0
    %p187 = por %p185, %p186
    %p188 = scmp.ne.s32.totalorder %s176, %s177
    %p189 = scmp.eq.s32.totalorder %s20, 1
    %p190 = por %p188, %p189
    %p192 = scmp.ne.s32.totalorder %s177, %s191
    %p193 = scmp.eq.s32.totalorder %s20, 0
    %p194 = por %p192, %p193
    %s195 = ssub.s32 %s14, %s21
    %p196 = scmp.eq.s32.totalorder %s195, 0
    %s198 = sadd.s32 %s197, 1
    %s199 = scalar_select %p196, %s197, %s198
    %p202 = pneg %p196
    %p203 = scmp.eq.s32.totalorder %s14, 1
    %p204 = por %p202, %p203
    %p205 = scmp.ne.s32.totalorder %s197, %s200
    %p206 = scmp.eq.s32.totalorder %s14, 0
    %p207 = por %p205, %p206
    %p208 = scmp.ne.s32.totalorder %s197, %s200
    %p209 = scmp.eq.s32.totalorder %s19, 1
    %p210 = por %p208, %p209
    %p211 = scmp.ne.s32.totalorder %s200, %s201
    %p212 = scmp.eq.s32.totalorder %s19, 0
    %p213 = por %p211, %p212
    %p214 = scmp.ne.s32.totalorder %s200, %s201
    %p215 = scmp.eq.s32.totalorder %s20, 1
    %p216 = por %p214, %p215
    %p218 = scmp.ne.s32.totalorder %s201, %s217
    %p219 = scmp.eq.s32.totalorder %s20, 0
    %p220 = por %p218, %p219
    %p221 = scmp.le.s32.totalorder 1, %s14
    %p222 = scmp.lt.s32.totalorder %s14, 3
    %p223 = pnand %p221, %p222
    %p224 = pneg %p223
    // Predicated region
    $region9: #{ssam_forward.1} parent=5 // pred_check
      _
    $region10: #{ssam_forward.1} parent=5 // pred_check_branch
      %226 = sbr.rel (%p223) target = $region12
    $region11: #{ssam_forward.1} parent=5 // pred_region
      %s227 = ssub.s32 %s14, 1
      // Predicated region
      $region13: #{ssam_forward.1} parent=11 // pred_check
        %p228 = pneg %p61
      $region14: #{ssam_forward.1} parent=11 // pred_check_branch
        %230 = sbr.rel (%p228) target = $region16
      $region15: #{ssam_forward.1} parent=11 // pred_region
        _
      $region16: #{ssam_forward.1} parent=11 // pred_fallthru
        _
      // Predicated region
      $region17: #{ssam_forward.1} parent=11 // pred_check
        %p231 = pneg %p82
      $region18: #{ssam_forward.1} parent=11 // pred_check_branch
        %233 = sbr.rel (%p231) target = $region20
      $region19: #{ssam_forward.1} parent=11 // pred_region
        _
      $region20: #{ssam_forward.1} parent=11 // pred_fallthru
        _
      // Predicated region
      $region21: #{ssam_forward.1} parent=11 // pred_check
        %p234 = pneg %p103
      $region22: #{ssam_forward.1} parent=11 // pred_check_branch
        %236 = sbr.rel (%p234) target = $region24
      $region23: #{ssam_forward.1} parent=11 // pred_region
        _
      $region24: #{ssam_forward.1} parent=11 // pred_fallthru
        _
      // Predicated region
      $region25: #{ssam_forward.1} parent=11 // pred_check
        %p237 = pneg %p124
      $region26: #{ssam_forward.1} parent=11 // pred_check_branch
        %239 = sbr.rel (%p237) target = $region28
      $region27: #{ssam_forward.1} parent=11 // pred_region
        _
      $region28: #{ssam_forward.1} parent=11 // pred_fallthru
        _
      // Predicated region
      $region29: #{ssam_forward.1} parent=11 // pred_check
        %p240 = pneg %p145
      $region30: #{ssam_forward.1} parent=11 // pred_check_branch
        %242 = sbr.rel (%p240) target = $region32
      $region31: #{ssam_forward.1} parent=11 // pred_region
        _
      $region32: #{ssam_forward.1} parent=11 // pred_fallthru
        _
      // Predicated region
      $region33: #{ssam_forward.1} parent=11 // pred_check
        %p243 = pneg %p166
      $region34: #{ssam_forward.1} parent=11 // pred_check_branch
        %245 = sbr.rel (%p243) target = $region36
      $region35: #{ssam_forward.1} parent=11 // pred_region
        _
      $region36: #{ssam_forward.1} parent=11 // pred_fallthru
        _
      // Predicated region
      $region37: #{ssam_forward.1} parent=11 // pred_check
        %p246 = pneg %p187
      $region38: #{ssam_forward.1} parent=11 // pred_check_branch
        %248 = sbr.rel (%p246) target = $region40
      $region39: #{ssam_forward.1} parent=11 // pred_region
        _
      $region40: #{ssam_forward.1} parent=11 // pred_fallthru
        _
    $region12: #{ssam_forward.1} parent=5 // pred_fallthru
      _
    %p249 = scmp.lt.s32.totalorder %s14, 2
    // Predicated region
    $region41: #{ssam_forward.1} parent=5 // pred_check
      %p250 = pneg %p249
    $region42: #{ssam_forward.1} parent=5 // pred_check_branch
      %252 = sbr.rel (%p250) target = $region44
    $region43: #{ssam_forward.1} parent=5 // pred_region
      // Predicated region
      $region45: #{ssam_forward.1} parent=43 // pred_check
        %p253 = pneg %p34
      $region46: #{ssam_forward.1} parent=43 // pred_check_branch
        %255 = sbr.rel (%p253) target = $region48
      $region47: #{ssam_forward.1} parent=43 // pred_region
        %p256 = scmp.lt.s32.totalorder %s14, 1
        %s257 = scalar_select %p256, %s14, 1
        %s258 = smul.addr %s257, 4
        %s259 = smul.addr %s258, 8
        %s260 = scalar_lea.vmem %s0, %s259
      $region48: #{ssam_forward.1} parent=43 // pred_fallthru
        _
    $region44: #{ssam_forward.1} parent=5 // pred_fallthru
      _
    %p261 = scmp.le.s32.totalorder 1, %s14
    %p262 = scmp.lt.s32.totalorder %s14, 3
    %p263 = pnand %p261, %p262
    %p264 = pneg %p263
    // Predicated region
    $region49: #{ssam_forward.1} parent=5 // pred_check
      _
    $region50: #{ssam_forward.1} parent=5 // pred_check_branch
      %266 = sbr.rel (%p263) target = $region52
    $region51: #{ssam_forward.1} parent=5 // pred_region
      %s267 = ssub.s32 %s14, 1
      %p268 = scmp.lt.s32.totalorder %s19, 1
      %s269 = scalar_select %p268, %s19, 1
      %s270 = smul.addr %s269, 4
      %s271 = smul.addr %s270, 8
      %s272 = scalar_lea.vmem %s0, %s271
      %p273 = pneg %p40
      %p274 = pneg %p37
      %p275 = pneg %p61
      %p276 = pneg %p58
      %p277 = pneg %p82
      %p278 = pneg %p79
      %p279 = pneg %p103
      %p280 = pneg %p100
      %p281 = pneg %p124
      %p282 = pneg %p121
      %p283 = pneg %p145
      %p284 = pneg %p142
      %p285 = pneg %p166
      %p286 = pneg %p163
      %p287 = pneg %p187
      %p288 = pneg %p184
      %p289 = pneg %p213
      %p290 = pneg %p210
      %p291 = scmp.lt.s32.totalorder %s19, 1
      %s292 = scalar_select %p291, %s19, 1
      %s293 = smul.addr %s292, 4
      %s294 = smul.addr %s293, 8
      %s295 = scalar_lea.vmem %s8, %s294
      %p296 = scmp.lt.s32.totalorder %s19, 1
      %s297 = scalar_select %p296, %s19, 1
      %s298 = smul.addr %s297, 4
      %s299 = smul.addr %s298, 8
      %s300 = scalar_lea.vmem %s0, %s299
      %p301 = scmp.lt.s32.totalorder %s19, 1
      %s302 = scalar_select %p301, %s19, 1
      %s303 = smul.addr %s302, 4
      %s304 = smul.addr %s303, 8
      %s305 = scalar_lea.vmem %s8, %s304
      %v307 = vld [vmem:[%s300] sm:$0xff]
      %v308 = vld [vmem:[%s300 + $0x8] sm:$0xff]
      %v309 = vld [vmem:[%s300 + $0x10] sm:$0xff]
      %v310 = vld [vmem:[%s300 + $0x18] sm:$0xff]
      %v311 = vpack.c.bf16 %v308, %v307
      %v312 = vpack.c.bf16 %v310, %v309
      %v313 = vld [vmem:[%s1] sm:$0xf]
      %v314 = vld [vmem:[%s1 + $0x4] sm:$0xf]
      %v315 = vld [vmem:[%s1 + $0x8] sm:$0xf]
      %v316 = vld [vmem:[%s1 + $0xc] sm:$0xf]
      %v317 = vld [vmem:[%s1 + $0x10] sm:$0xf]
      %v318 = vld [vmem:[%s1 + $0x14] sm:$0xf]
      %v319 = vld [vmem:[%s1 + $0x18] sm:$0xf]
      %v320 = vld [vmem:[%s1 + $0x1c] sm:$0xf]
      %v329 = vunpack.c.l.b16 %v313
      %v330 = vunpack.c.l.b16 %v314
      %v331 = vunpack.c.l.b16 %v315
      %v332 = vunpack.c.l.b16 %v316
      %v333 = vunpack.c.l.b16 %v317
      %v334 = vunpack.c.l.b16 %v318
      %v335 = vunpack.c.l.b16 %v319
      %v336 = vunpack.c.l.b16 %v320
      %v337 = vpack.c.b16 %v330, %v329
      %v338 = vpack.c.b16 %v332, %v331
      %v339 = vpack.c.b16 %v334, %v333
      %v340 = vpack.c.b16 %v336, %v335
      %vm345 = vcmask 523264
      %v347 = vsel %vm345, %v311, 0
      %v350 = vsel %vm345, %v312, 0
      %352 = vmatprep.subr.bf16.mxu0 0
      %353 = vmatpush1.bf16.msra.mxu0 %v337
      %354 = vmatprep.subr.bf16.mxu0 0
      %355 = vmatpush1.bf16.msra.mxu0 %v338
      %356 = vmatprep.subr.bf16.mxu0 0
      %357 = vmatpush1.bf16.msra.mxu0 %v339
      %358 = vmatprep.subr.bf16.mxu0 0
      %359 = vmatpush1.bf16.msra.mxu0 %v340
      %360 = vmatprep.subr.bf16.mxu0 0
      %361 = vmatpush1.bf16.msra.mxu0 0
      %362 = vmatprep.subr.bf16.mxu0 0
      %363 = vmatpush1.bf16.msra.mxu0 0
      %364 = vmatprep.subr.bf16.mxu0 0
      %365 = vmatpush1.bf16.msra.mxu0 0
      %366 = vmatprep.subr.bf16.mxu0 0
      %367 = vmatpush1.bf16.msra.mxu0 0
      %368 = vmatprep.subr.bf16.mxu0 0
      %369 = vmatpush1.bf16.msra.mxu0 0
      %370 = vmatprep.subr.bf16.mxu0 0
      %371 = vmatpush1.bf16.msra.mxu0 0
      %372 = vmatprep.subr.bf16.mxu0 0
      %373 = vmatpush1.bf16.msra.mxu0 0
      %374 = vmatprep.subr.bf16.mxu0 0
      %375 = vmatpush1.bf16.msra.mxu0 0
      %376 = vmatprep.subr.bf16.mxu0 0
      %377 = vmatpush1.bf16.msra.mxu0 0
      %378 = vmatprep.subr.bf16.mxu0 0
      %379 = vmatpush1.bf16.msra.mxu0 0
      %380 = vmatprep.subr.bf16.mxu0 0
      %381 = vmatpush1.bf16.msra.mxu0 0
      %382 = vmatprep.subr.bf16.mxu0 0
      %383 = vmatpush1.bf16.msra.mxu0 0
      %384 = vmatprep.mubr.bf16.mxu0 0
      %385 = vmatmul.mubr.bf16.gmra.mrb[0].mxu0 %v347
      %v386 = vpop.f32.mrb[0].mxu0
      %v387 = vadd.f32 0.0, %v386
      %v388 = vpop.f32.mrb[0].mxu0
      %v389 = vpop.f32.mrb[0].mxu0
      %v390 = vadd.f32 0.0, %v389
      %v391 = vpop.f32.mrb[0].mxu0
      %392 = vmatprep.mubr.bf16.mxu0 0
      %393 = vmatmul.mubr.bf16.gmra.mrb[0].mxu0 %v350
      %v394 = vpop.f32.mrb[0].mxu0
      %v395 = vadd.f32 0.0, %v394
      %v396 = vpop.f32.mrb[0].mxu0
      %v397 = vpop.f32.mrb[0].mxu0
      %v398 = vadd.f32 0.0, %v397
      %v399 = vpop.f32.mrb[0].mxu0
      %400 = vdwg.mxu0
      %s401 = scalar_lea.vmem %s1, 32
      %v402 = vld [vmem:[%s401] sm:$0xf]
      %v403 = vld [vmem:[%s401 + $0x4] sm:$0xf]
      %v404 = vld [vmem:[%s401 + $0x8] sm:$0xf]
      %v405 = vld [vmem:[%s401 + $0xc] sm:$0xf]
      %v406 = vld [vmem:[%s401 + $0x10] sm:$0xf]
      %v407 = vld [vmem:[%s401 + $0x14] sm:$0xf]
      %v408 = vld [vmem:[%s401 + $0x18] sm:$0xf]
      %v409 = vld [vmem:[%s401 + $0x1c] sm:$0xf]
      %v418 = vunpack.c.l.b16 %v402
      %v419 = vunpack.c.l.b16 %v403
      %v420 = vunpack.c.l.b16 %v404
      %v421 = vunpack.c.l.b16 %v405
      %v422 = vunpack.c.l.b16 %v406
      %v423 = vunpack.c.l.b16 %v407
      %v424 = vunpack.c.l.b16 %v408
      %v425 = vunpack.c.l.b16 %v409
      %v426 = vpack.c.b16 %v419, %v418
      %v427 = vpack.c.b16 %v421, %v420
      %v428 = vpack.c.b16 %v423, %v422
      %v429 = vpack.c.b16 %v425, %v424
      %434 = vmatprep.subr.bf16.mxu0 0
      %435 = vmatpush1.bf16.msra.mxu0 %v426
      %436 = vmatprep.subr.bf16.mxu0 0
      %437 = vmatpush1.bf16.msra.mxu0 %v427
      %438 = vmatprep.subr.bf16.mxu0 0
      %439 = vmatpush1.bf16.msra.mxu0 %v428
      %440 = vmatprep.subr.bf16.mxu0 0
      %441 = vmatpush1.bf16.msra.mxu0 %v429
      %442 = vmatprep.subr.bf16.mxu0 0
      %443 = vmatpush1.bf16.msra.mxu0 0
      %444 = vmatprep.subr.bf16.mxu0 0
      %445 = vmatpush1.bf16.msra.mxu0 0
      %446 = vmatprep.subr.bf16.mxu0 0
      %447 = vmatpush1.bf16.msra.mxu0 0
      %448 = vmatprep.subr.bf16.mxu0 0
      %449 = vmatpush1.bf16.msra.mxu0 0
      %450 = vmatprep.subr.bf16.mxu0 0
      %451 = vmatpush1.bf16.msra.mxu0 0
      %452 = vmatprep.subr.bf16.mxu0 0
      %453 = vmatpush1.bf16.msra.mxu0 0
      %454 = vmatprep.subr.bf16.mxu0 0
      %455 = vmatpush1.bf16.msra.mxu0 0
      %456 = vmatprep.subr.bf16.mxu0 0
      %457 = vmatpush1.bf16.msra.mxu0 0
      %458 = vmatprep.subr.bf16.mxu0 0
      %459 = vmatpush1.bf16.msra.mxu0 0
      %460 = vmatprep.subr.bf16.mxu0 0
      %461 = vmatpush1.bf16.msra.mxu0 0
      %462 = vmatprep.subr.bf16.mxu0 0
      %463 = vmatpush1.bf16.msra.mxu0 0
      %464 = vmatprep.subr.bf16.mxu0 0
      %465 = vmatpush1.bf16.msra.mxu0 0
      %466 = vmatprep.mubr.bf16.mxu0 0
      %467 = vmatmul.mubr.bf16.gmra.mrb[0].mxu0 %v347
      %v468 = vpop.f32.mrb[0].mxu0
      %v469 = vadd.f32 0.0, %v468
      %v470 = vpop.f32.mrb[0].mxu0
      %v471 = vpop.f32.mrb[0].mxu0
      %v472 = vadd.f32 0.0, %v471
      %v473 = vpop.f32.mrb[0].mxu0
      %474 = vmatprep.mubr.bf16.mxu0 0
      %475 = vmatmul.mubr.bf16.gmra.mrb[0].mxu0 %v350
      %v476 = vpop.f32.mrb[0].mxu0
      %v477 = vadd.f32 0.0, %v476
      %v478 = vpop.f32.mrb[0].mxu0
      %v479 = vpop.f32.mrb[0].mxu0
      %v480 = vadd.f32 0.0, %v479
      %v481 = vpop.f32.mrb[0].mxu0
      %482 = vdwg.mxu0
      %s483 = scalar_lea.vmem %s1, 64
      %v484 = vld [vmem:[%s483] sm:$0xf]
      %v485 = vld [vmem:[%s483 + $0x4] sm:$0xf]
      %v486 = vld [vmem:[%s483 + $0x8] sm:$0xf]
      %v487 = vld [vmem:[%s483 + $0xc] sm:$0xf]
      %v488 = vld [vmem:[%s483 + $0x10] sm:$0xf]
      %v489 = vld [vmem:[%s483 + $0x14] sm:$0xf]
      %v490 = vld [vmem:[%s483 + $0x18] sm:$0xf]
      %v491 = vld [vmem:[%s483 + $0x1c] sm:$0xf]
      %v500 = vunpack.c.l.b16 %v484
      %v501 = vunpack.c.l.b16 %v485
      %v502 = vunpack.c.l.b16 %v486
      %v503 = vunpack.c.l.b16 %v487
      %v504 = vunpack.c.l.b16 %v488
      %v505 = vunpack.c.l.b16 %v489
      %v506 = vunpack.c.l.b16 %v490
      %v507 = vunpack.c.l.b16 %v491
      %v508 = vpack.c.b16 %v501, %v500
      %v509 = vpack.c.b16 %v503, %v502
      %v510 = vpack.c.b16 %v505, %v504
      %v511 = vpack.c.b16 %v507, %v506
      %516 = vmatprep.subr.bf16.mxu0 0
      %517 = vmatpush1.bf16.msra.mxu0 %v508
      %518 = vmatprep.subr.bf16.mxu0 0
      %519 = vmatpush1.bf16.msra.mxu0 %v509
      %520 = vmatprep.subr.bf16.mxu0 0
      %521 = vmatpush1.bf16.msra.mxu0 %v510
      %522 = vmatprep.subr.bf16.mxu0 0
      %523 = vmatpush1.bf16.msra.mxu0 %v511
      %524 = vmatprep.subr.bf16.mxu0 0
      %525 = vmatpush1.bf16.msra.mxu0 0
      %526 = vmatprep.subr.bf16.mxu0 0
      %527 = vmatpush1.bf16.msra.mxu0 0
      %528 = vmatprep.subr.bf16.mxu0 0
      %529 = vmatpush1.bf16.msra.mxu0 0
      %530 = vmatprep.subr.bf16.mxu0 0
      %531 = vmatpush1.bf16.msra.mxu0 0
      %532 = vmatprep.subr.bf16.mxu0 0
      %533 = vmatpush1.bf16.msra.mxu0 0
      %534 = vmatprep.subr.bf16.mxu0 0
      %535 = vmatpush1.bf16.msra.mxu0 0
      %536 = vmatprep.subr.bf16.mxu0 0
      %537 = vmatpush1.bf16.msra.mxu0 0
      %538 = vmatprep.subr.bf16.mxu0 0
      %539 = vmatpush1.bf16.msra.mxu0 0
      %540 = vmatprep.subr.bf16.mxu0 0
      %541 = vmatpush1.bf16.msra.mxu0 0
      %542 = vmatprep.subr.bf16.mxu0 0
      %543 = vmatpush1.bf16.msra.mxu0 0
      %544 = vmatprep.subr.bf16.mxu0 0
      %545 = vmatpush1.bf16.msra.mxu0 0
      %546 = vmatprep.subr.bf16.mxu0 0
      %547 = vmatpush1.bf16.msra.mxu0 0
      %548 = vmatprep.mubr.bf16.mxu0 0
      %549 = vmatmul.mubr.bf16.gmra.mrb[0].mxu0 %v347
      %v550 = vpop.f32.mrb[0].mxu0
      %v551 = vadd.f32 0.0, %v550
      %v552 = vpop.f32.mrb[0].mxu0
      %v553 = vpop.f32.mrb[0].mxu0
      %v554 = vadd.f32 0.0, %v553
      %v555 = vpop.f32.mrb[0].mxu0
      %556 = vmatprep.mubr.bf16.mxu0 0
      %557 = vmatmul.mubr.bf16.gmra.mrb[0].mxu0 %v350
      %v558 = vpop.f32.mrb[0].mxu0
      %v559 = vadd.f32 0.0, %v558
      %v560 = vpop.f32.mrb[0].mxu0
      %v561 = vpop.f32.mrb[0].mxu0
      %v562 = vadd.f32 0.0, %v561
      %v563 = vpop.f32.mrb[0].mxu0
      %564 = vdwg.mxu0
      %s565 = scalar_lea.vmem %s1, 96
      %v566 = vld [vmem:[%s565] sm:$0xf]
      %v567 = vld [vmem:[%s565 + $0x4] sm:$0xf]
      %v568 = vld [vmem:[%s565 + $0x8] sm:$0xf]
      %v569 = vld [vmem:[%s565 + $0xc] sm:$0xf]
      %v570 = vld [vmem:[%s565 + $0x10] sm:$0xf]
      %v571 = vld [vmem:[%s565 + $0x14] sm:$0xf]
      %v572 = vld [vmem:[%s565 + $0x18] sm:$0xf]
      %v573 = vld [vmem:[%s565 + $0x1c] sm:$0xf]
      %v582 = vunpack.c.l.b16 %v566
      %v583 = vunpack.c.l.b16 %v567
      %v584 = vunpack.c.l.b16 %v568
      %v585 = vunpack.c.l.b16 %v569
      %v586 = vunpack.c.l.b16 %v570
      %v587 = vunpack.c.l.b16 %v571
      %v588 = vunpack.c.l.b16 %v572
      %v589 = vunpack.c.l.b16 %v573
      %v590 = vpack.c.b16 %v583, %v582
      %v591 = vpack.c.b16 %v585, %v584
      %v592 = vpack.c.b16 %v587, %v586
      %v593 = vpack.c.b16 %v589, %v588
      %598 = vmatprep.subr.bf16.mxu0 0
      %599 = vmatpush1.bf16.msra.mxu0 %v590
      %600 = vmatprep.subr.bf16.mxu0 0
      %601 = vmatpush1.bf16.msra.mxu0 %v591
      %602 = vmatprep.subr.bf16.mxu0 0
      %603 = vmatpush1.bf16.msra.mxu0 %v592
      %604 = vmatprep.subr.bf16.mxu0 0
      %605 = vmatpush1.bf16.msra.mxu0 %v593
      %606 = vmatprep.subr.bf16.mxu0 0
      %607 = vmatpush1.bf16.msra.mxu0 0
      %608 = vmatprep.subr.bf16.mxu0 0
      %609 = vmatpush1.bf16.msra.mxu0 0
      %610 = vmatprep.subr.bf16.mxu0 0
      %611 = vmatpush1.bf16.msra.mxu0 0
      %612 = vmatprep.subr.bf16.mxu0 0
      %613 = vmatpush1.bf16.msra.mxu0 0
      %614 = vmatprep.subr.bf16.mxu0 0
      %615 = vmatpush1.bf16.msra.mxu0 0
      %616 = vmatprep.subr.bf16.mxu0 0
      %617 = vmatpush1.bf16.msra.mxu0 0
      %618 = vmatprep.subr.bf16.mxu0 0
      %619 = vmatpush1.bf16.msra.mxu0 0
      %620 = vmatprep.subr.bf16.mxu0 0
      %621 = vmatpush1.bf16.msra.mxu0 0
      %622 = vmatprep.subr.bf16.mxu0 0
      %623 = vmatpush1.bf16.msra.mxu0 0
      %624 = vmatprep.subr.bf16.mxu0 0
      %625 = vmatpush1.bf16.msra.mxu0 0
      %626 = vmatprep.subr.bf16.mxu0 0
      %627 = vmatpush1.bf16.msra.mxu0 0
      %628 = vmatprep.subr.bf16.mxu0 0
      %629 = vmatpush1.bf16.msra.mxu0 0
      %630 = vmatprep.mubr.bf16.mxu0 0
      %631 = vmatmul.mubr.bf16.gmra.mrb[0].mxu0 %v347
      %v632 = vpop.f32.mrb[0].mxu0
      %v633 = vadd.f32 0.0, %v632
      %v634 = vpop.f32.mrb[0].mxu0
      %v635 = vpop.f32.mrb[0].mxu0
      %v636 = vadd.f32 0.0, %v635
      %v637 = vpop.f32.mrb[0].mxu0
      %638 = vmatprep.mubr.bf16.mxu0 0
      %639 = vmatmul.mubr.bf16.gmra.mrb[0].mxu0 %v350
      %v640 = vpop.f32.mrb[0].mxu0
      %v641 = vadd.f32 0.0, %v640
      %v642 = vpop.f32.mrb[0].mxu0
      %v643 = vpop.f32.mrb[0].mxu0
      %v644 = vadd.f32 0.0, %v643
      %v645 = vpop.f32.mrb[0].mxu0
      %646 = vdwg.mxu0
      %v647 = vld [vmem:[%s6] sm:$0xff]
      %v648 = vld [vmem:[%s6 + $0x8] sm:$0xff]
      %v649 = vld [vmem:[%s6 + $0x10] sm:$0xff]
      %v650 = vld [vmem:[%s6 + $0x18] sm:$0xff]
      %652 = vset.pattern.permute.xlu0 0
      %653 = vperm.xlu0 %652, %v647
      %v654 = vpop.permute.xlu0 %653
      %657 = vset.pattern.permute.xlu0 0
      %658 = vperm.xlu0 %657, %v648
      %v659 = vpop.permute.xlu0 %658
      %662 = vset.pattern.permute.xlu0 0
      %663 = vperm.xlu0 %662, %v649
      %v664 = vpop.permute.xlu0 %663
      %667 = vset.pattern.permute.xlu0 0
      %668 = vperm.xlu0 %667, %v650
      %v669 = vpop.permute.xlu0 %668
      %v671 = vmul.f32 %v654, %v387
      %v672 = vmul.f32 %v659, %v390
      %v673 = vmul.f32 %v664, %v395
      %v674 = vmul.f32 %v669, %v398
      %675 = vset.pattern.permute.xlu0 1
      %676 = vperm.xlu0 %675, %v647
      %v677 = vpop.permute.xlu0 %676
      %679 = vset.pattern.permute.xlu0 1
      %680 = vperm.xlu0 %679, %v648
      %v681 = vpop.permute.xlu0 %680
      %683 = vset.pattern.permute.xlu0 1
      %684 = vperm.xlu0 %683, %v649
      %v685 = vpop.permute.xlu0 %684
      %687 = vset.pattern.permute.xlu0 1
      %688 = vperm.xlu0 %687, %v650
      %v689 = vpop.permute.xlu0 %688
      %v691 = vmul.f32 %v677, %v307
      %v692 = vmul.f32 %v681, %v308
      %v693 = vmul.f32 %v685, %v309
      %v694 = vmul.f32 %v689, %v310
      %v695 = vadd.f32 %v671, %v691
      %v696 = vadd.f32 %v672, %v692
      %v697 = vadd.f32 %v673, %v693
      %v698 = vadd.f32 %v674, %v694
      %699 = vset.pattern.permute.xlu0 2
      %700 = vperm.xlu0 %699, %v647
      %v701 = vpop.permute.xlu0 %700
      %703 = vset.pattern.permute.xlu0 2
      %704 = vperm.xlu0 %703, %v648
      %v705 = vpop.permute.xlu0 %704
      %707 = vset.pattern.permute.xlu0 2
      %708 = vperm.xlu0 %707, %v649
      %v709 = vpop.permute.xlu0 %708
      %711 = vset.pattern.permute.xlu0 2
      %712 = vperm.xlu0 %711, %v650
      %v713 = vpop.permute.xlu0 %712
      %v715 = vmul.f32 %v701, %v469
      %v716 = vmul.f32 %v705, %v472
      %v717 = vmul.f32 %v709, %v477
      %v718 = vmul.f32 %v713, %v480
      %v719 = vadd.f32 %v695, %v715
      %v720 = vadd.f32 %v696, %v716
      %v721 = vadd.f32 %v697, %v717
      %v722 = vadd.f32 %v698, %v718
      %723 = vset.pattern.permute.xlu0 6
      %724 = vperm.xlu0 %723, %v647
      %v725 = vpop.permute.xlu0 %724
      %727 = vset.pattern.permute.xlu0 6
      %728 = vperm.xlu0 %727, %v648
      %v729 = vpop.permute.xlu0 %728
      %731 = vset.pattern.permute.xlu0 6
      %732 = vperm.xlu0 %731, %v649
      %v733 = vpop.permute.xlu0 %732
      %735 = vset.pattern.permute.xlu0 6
      %736 = vperm.xlu0 %735, %v650
      %v737 = vpop.permute.xlu0 %736
      %v739 = vadd.f32 %v719, %v725
      %v740 = vadd.f32 %v720, %v729
      %v741 = vadd.f32 %v721, %v733
      %v742 = vadd.f32 %v722, %v737
      %v743 = vld [vmem:[%s2] sm:$0xf]
      %v744 = vld [vmem:[%s2 + $0x4] sm:$0xf]
      %v745 = vld [vmem:[%s2 + $0x8] sm:$0xf]
      %v746 = vld [vmem:[%s2 + $0xc] sm:$0xf]
      %v747 = vld [vmem:[%s2 + $0x10] sm:$0xf]
      %v748 = vld [vmem:[%s2 + $0x14] sm:$0xf]
      %v749 = vld [vmem:[%s2 + $0x18] sm:$0xf]
      %v750 = vld [vmem:[%s2 + $0x1c] sm:$0xf]
      %v751 = vld [vmem:[%s2 + $0x20] sm:$0xf]
      %v752 = vld [vmem:[%s2 + $0x24] sm:$0xf]
      %v753 = vld [vmem:[%s2 + $0x28] sm:$0xf]
      %v754 = vld [vmem:[%s2 + $0x2c] sm:$0xf]
      %v755 = vpack.c.bf16 %v740, %v739
      %v756 = vpack.c.bf16 %v742, %v741
      %v757 = vld [vmem:[%s3] sm:$0xff]
      %v758 = vld [vmem:[%s3 + $0x8] sm:$0xff]
      %v759 = vld [vmem:[%s3 + $0x10] sm:$0xff]
      %v760 = vld [vmem:[%s3 + $0x18] sm:$0xff]
      %v761 = vld [vmem:[%s3 + $0x20] sm:$0xff]
      %v762 = vld [vmem:[%s3 + $0x28] sm:$0xff]
      %v763 = vld [vmem:[%s3 + $0x30] sm:$0xff]
      %v764 = vld [vmem:[%s3 + $0x38] sm:$0xff]
      %v765 = vld [vmem:[%s3 + $0x40] sm:$0xff]
      %v766 = vld [vmem:[%s3 + $0x48] sm:$0xff]
      %v767 = vld [vmem:[%s3 + $0x50] sm:$0xff]
      %v768 = vld [vmem:[%s3 + $0x58] sm:$0xff]
      %770 = vset.pattern.permute.xlu0 0
      %771 = vperm.xlu0 %770, %v757
      %v772 = vpop.permute.xlu0 %771
      %775 = vset.pattern.permute.xlu0 0
      %776 = vperm.xlu0 %775, %v758
      %v777 = vpop.permute.xlu0 %776
      %780 = vset.pattern.permute.xlu0 0
      %781 = vperm.xlu0 %780, %v759
      %v782 = vpop.permute.xlu0 %781
      %785 = vset.pattern.permute.xlu0 0
      %786 = vperm.xlu0 %785, %v760
      %v787 = vpop.permute.xlu0 %786
      %790 = vset.pattern.permute.xlu0 0
      %791 = vperm.xlu0 %790, %v761
      %v792 = vpop.permute.xlu0 %791
      %795 = vset.pattern.permute.xlu0 0
      %796 = vperm.xlu0 %795, %v762
      %v797 = vpop.permute.xlu0 %796
      %800 = vset.pattern.permute.xlu0 0
      %801 = vperm.xlu0 %800, %v763
      %v802 = vpop.permute.xlu0 %801
      %805 = vset.pattern.permute.xlu0 0
      %806 = vperm.xlu0 %805, %v764
      %v807 = vpop.permute.xlu0 %806
      %810 = vset.pattern.permute.xlu0 0
      %811 = vperm.xlu0 %810, %v765
      %v812 = vpop.permute.xlu0 %811
      %815 = vset.pattern.permute.xlu0 0
      %816 = vperm.xlu0 %815, %v766
      %v817 = vpop.permute.xlu0 %816
      %820 = vset.pattern.permute.xlu0 0
      %821 = vperm.xlu0 %820, %v767
      %v822 = vpop.permute.xlu0 %821
      %825 = vset.pattern.permute.xlu0 0
      %826 = vperm.xlu0 %825, %v768
      %v827 = vpop.permute.xlu0 %826
      %v841 = vunpack.c.l.b16 %v743
      %v842 = vunpack.c.l.b16 %v744
      %v843 = vunpack.c.l.b16 %v745
      %v844 = vunpack.c.l.b16 %v746
      %v845 = vunpack.c.l.b16 %v747
      %v846 = vunpack.c.l.b16 %v748
      %v847 = vunpack.c.l.b16 %v749
      %v848 = vunpack.c.l.b16 %v750
      %v849 = vunpack.c.l.b16 %v751
      %v850 = vunpack.c.l.b16 %v752
      %v851 = vunpack.c.l.b16 %v753
      %v852 = vunpack.c.l.b16 %v754
      %v853 = vpack.c.b16 %v842, %v841
      %v854 = vpack.c.b16 %v844, %v843
      %v855 = vpack.c.b16 %v846, %v845
      %v856 = vpack.c.b16 %v848, %v847
      %v857 = vpack.c.b16 %v850, %v849
      %v858 = vpack.c.b16 %v852, %v851
      %vm859 = vcmask 261120
      %v861 = vsel %vm859, %v853, 0
      %v864 = vsel %vm859, %v854, 0
      %v867 = vsel %vm859, %v855, 0
      %v870 = vsel %vm859, %v856, 0
      %v873 = vsel %vm859, %v857, 0
      %v876 = vsel %vm859, %v858, 0
      %878 = vmatprep.subr.bf16.mxu0 0
      %879 = vmatpush1.bf16.msra.mxu0 %v755
      %880 = vmatprep.subr.bf16.mxu0 0
      %881 = vmatpush1.bf16.msra.mxu0 %v756
      %882 = vmatprep.subr.bf16.mxu0 0
      %883 = vmatpush1.bf16.msra.mxu0 0
      %884 = vmatprep.subr.bf16.mxu0 0
      %885 = vmatpush1.bf16.msra.mxu0 0
      %886 = vmatprep.subr.bf16.mxu0 0
      %887 = vmatpush1.bf16.msra.mxu0 0
      %888 = vmatprep.subr.bf16.mxu0 0
      %889 = vmatpush1.bf16.msra.mxu0 0
      %890 = vmatprep.subr.bf16.mxu0 0
      %891 = vmatpush1.bf16.msra.mxu0 0
      %892 = vmatprep.subr.bf16.mxu0 0
      %893 = vmatpush1.bf16.msra.mxu0 0
      %894 = vmatprep.subr.bf16.mxu0 0
      %895 = vmatpush1.bf16.msra.mxu0 0
      %896 = vmatprep.subr.bf16.mxu0 0
      %897 = vmatpush1.bf16.msra.mxu0 0
      %898 = vmatprep.subr.bf16.mxu0 0
      %899 = vmatpush1.bf16.msra.mxu0 0
      %900 = vmatprep.subr.bf16.mxu0 0
      %901 = vmatpush1.bf16.msra.mxu0 0
      %902 = vmatprep.subr.bf16.mxu0 0
      %903 = vmatpush1.bf16.msra.mxu0 0
      %904 = vmatprep.subr.bf16.mxu0 0
      %905 = vmatpush1.bf16.msra.mxu0 0
      %906 = vmatprep.subr.bf16.mxu0 0
      %907 = vmatpush1.bf16.msra.mxu0 0
      %908 = vmatprep.subr.bf16.mxu0 0
      %909 = vmatpush1.bf16.msra.mxu0 0
      %910 = vmatprep.mubr.bf16.mxu0 0
      %911 = vmatmul.mubr.bf16.gmra.mrb[0].mxu0 %v861
      %v912 = vpop.f32.mrb[0].mxu0
      %v913 = vadd.f32 %v772, %v912
      %v914 = vpop.f32.mrb[0].mxu0
      %v915 = vpop.f32.mrb[0].mxu0
      %v916 = vadd.f32 %v777, %v915
      %v917 = vpop.f32.mrb[0].mxu0
      %918 = vmatprep.mubr.bf16.mxu0 0
      %919 = vmatmul.mubr.bf16.gmra.mrb[0].mxu0 %v864
      %v920 = vpop.f32.mrb[0].mxu0
      %v921 = vadd.f32 %v782, %v920
      %v922 = vpop.f32.mrb[0].mxu0
      %v923 = vpop.f32.mrb[0].mxu0
      %v924 = vadd.f32 %v787, %v923
      %v925 = vpop.f32.mrb[0].mxu0
      %926 = vmatprep.mubr.bf16.mxu0 0
      %927 = vmatmul.mubr.bf16.gmra.mrb[0].mxu0 %v867
      %v928 = vpop.f32.mrb[0].mxu0
      %v929 = vadd.f32 %v792, %v928
      %v930 = vpop.f32.mrb[0].mxu0
      %v931 = vpop.f32.mrb[0].mxu0
      %v932 = vadd.f32 %v797, %v931
      %v933 = vpop.f32.mrb[0].mxu0
      %934 = vmatprep.mubr.bf16.mxu0 0
      %935 = vmatmul.mubr.bf16.gmra.mrb[0].mxu0 %v870
      %v936 = vpop.f32.mrb[0].mxu0
      %v937 = vadd.f32 %v802, %v936
      %v938 = vpop.f32.mrb[0].mxu0
      %v939 = vpop.f32.mrb[0].mxu0
      %v940 = vadd.f32 %v807, %v939
      %v941 = vpop.f32.mrb[0].mxu0
      %942 = vmatprep.mubr.bf16.mxu0 0
      %943 = vmatmul.mubr.bf16.gmra.mrb[0].mxu0 %v873
      %v944 = vpop.f32.mrb[0].mxu0
      %v945 = vadd.f32 %v812, %v944
      %v946 = vpop.f32.mrb[0].mxu0
      %v947 = vpop.f32.mrb[0].mxu0
      %v948 = vadd.f32 %v817, %v947
      %v949 = vpop.f32.mrb[0].mxu0
      %950 = vmatprep.mubr.bf16.mxu0 0
      %951 = vmatmul.mubr.bf16.gmra.mrb[0].mxu0 %v876
      %v952 = vpop.f32.mrb[0].mxu0
      %v953 = vadd.f32 %v822, %v952
      %v954 = vpop.f32.mrb[0].mxu0
      %v955 = vpop.f32.mrb[0].mxu0
      %v956 = vadd.f32 %v827, %v955
      %v957 = vpop.f32.mrb[0].mxu0
      %958 = vdwg.mxu0
      %959 = vxpose.xlu0.b32.start [1/16] %v913, 128
      %960 = vxpose.xlu0.b32.cont [2/16] %v916, 128
      %961 = vxpose.xlu0.b32.cont [3/16] %v921, 128
      %962 = vxpose.xlu0.b32.cont [4/16] %v924, 128
      %963 = vxpose.xlu0.b32.cont [5/16] 0.0, 128
      %964 = vxpose.xlu0.b32.cont [6/16] 0.0, 128
      %965 = vxpose.xlu0.b32.cont [7/16] 0.0, 128
      %966 = vxpose.xlu0.b32.cont [8/16] 0.0, 128
      %967 = vxpose.xlu0.b32.cont [9/16] 0.0, 128
      %968 = vxpose.xlu0.b32.cont [10/16] 0.0, 128
      %969 = vxpose.xlu0.b32.cont [11/16] 0.0, 128
      %970 = vxpose.xlu0.b32.cont [12/16] 0.0, 128
      %971 = vxpose.xlu0.b32.cont [13/16] 0.0, 128
      %972 = vxpose.xlu0.b32.cont [14/16] 0.0, 128
      %973 = vxpose.xlu0.b32.cont [15/16] 0.0, 128
      %974 = vxpose.xlu0.b32.end [16/16] 0.0, 128
      %v975 = vpop.trf.xlu0
      %v976 = vpop.trf.xlu0
      %v977 = vpop.trf.xlu0
      %v978 = vpop.trf.xlu0
      %v979 = vpop.trf.xlu0
      %v980 = vpop.trf.xlu0
      %v981 = vpop.trf.xlu0
      %v982 = vpop.trf.xlu0
      %v983 = vpop.trf.xlu0
      %v984 = vpop.trf.xlu0
      %v985 = vpop.trf.xlu0
      %v986 = vpop.trf.xlu0
      %v987 = vpop.trf.xlu0
      %v988 = vpop.trf.xlu0
      %v989 = vpop.trf.xlu0
      %v990 = vpop.trf.xlu0
      %v991 = vpack.c.bf16 %v976, %v975
      %v992 = vpack.c.bf16 %v978, %v977
      %v993 = vpack.c.bf16 %v980, %v979
      %v994 = vpack.c.bf16 %v982, %v981
      %v995 = vpack.c.bf16 %v932, %v929
      %v996 = vpack.c.bf16 %v940, %v937
      %v998 = vsel %vm859, %v991, 0
      %v1001 = vsel %vm859, %v992, 0
      %v1004 = vsel %vm859, %v993, 0
      %v1007 = vsel %vm859, %v994, 0
      %1009 = vmatprep.subr.bf16.mxu0 0
      %1010 = vmatpush1.bf16.msra.mxu0 %v995
      %1011 = vmatprep.subr.bf16.mxu0 0
      %1012 = vmatpush1.bf16.msra.mxu0 %v996
      %1013 = vmatprep.subr.bf16.mxu0 0
      %1014 = vmatpush1.bf16.msra.mxu0 0
      %1015 = vmatprep.subr.bf16.mxu0 0
      %1016 = vmatpush1.bf16.msra.mxu0 0
      %1017 = vmatprep.subr.bf16.mxu0 0
      %1018 = vmatpush1.bf16.msra.mxu0 0
      %1019 = vmatprep.subr.bf16.mxu0 0
      %1020 = vmatpush1.bf16.msra.mxu0 0
      %1021 = vmatprep.subr.bf16.mxu0 0
      %1022 = vmatpush1.bf16.msra.mxu0 0
      %1023 = vmatprep.subr.bf16.mxu0 0
      %1024 = vmatpush1.bf16.msra.mxu0 0
      %1025 = vmatprep.subr.bf16.mxu0 0
      %1026 = vmatpush1.bf16.msra.mxu0 0
      %1027 = vmatprep.subr.bf16.mxu0 0
      %1028 = vmatpush1.bf16.msra.mxu0 0
      %1029 = vmatprep.subr.bf16.mxu0 0
      %1030 = vmatpush1.bf16.msra.mxu0 0
      %1031 = vmatprep.subr.bf16.mxu0 0
      %1032 = vmatpush1.bf16.msra.mxu0 0
      %1033 = vmatprep.subr.bf16.mxu0 0
      %1034 = vmatpush1.bf16.msra.mxu0 0
      %1035 = vmatprep.subr.bf16.mxu0 0
      %1036 = vmatpush1.bf16.msra.mxu0 0
      %1037 = vmatprep.subr.bf16.mxu0 0
      %1038 = vmatpush1.bf16.msra.mxu0 0
      %1039 = vmatprep.subr.bf16.mxu0 0
      %1040 = vmatpush1.bf16.msra.mxu0 0
      %1041 = vmatprep.mubr.bf16.mxu0 0
      %1042 = vmatmul.mubr.bf16.gmra.mrb[0].mxu0 %v998
      %v1043 = vpop.f32.mrb[0].mxu0
      %v1044 = vadd.f32 0.0, %v1043
      %v1045 = vpop.f32.mrb[0].mxu0
      %v1046 = vpop.f32.mrb[0].mxu0
      %v1047 = vadd.f32 0.0, %v1046
      %v1048 = vpop.f32.mrb[0].mxu0
      %1049 = vmatprep.mubr.bf16.mxu0 0
      %1050 = vmatmul.mubr.bf16.gmra.mrb[0].mxu0 %v1001
      %v1051 = vpop.f32.mrb[0].mxu0
      %v1052 = vadd.f32 0.0, %v1051
      %v1053 = vpop.f32.mrb[0].mxu0
      %v1054 = vpop.f32.mrb[0].mxu0
      %v1055 = vadd.f32 0.0, %v1054
      %v1056 = vpop.f32.mrb[0].mxu0
      %1057 = vmatprep.mubr.bf16.mxu0 0
      %1058 = vmatmul.mubr.bf16.gmra.mrb[0].mxu0 %v1004
      %v1059 = vpop.f32.mrb[0].mxu0
      %v1060 = vadd.f32 0.0, %v1059
      %v1061 = vpop.f32.mrb[0].mxu0
      %v1062 = vpop.f32.mrb[0].mxu0
      %v1063 = vadd.f32 0.0, %v1062
      %v1064 = vpop.f32.mrb[0].mxu0
      %1065 = vmatprep.mubr.bf16.mxu0 0
      %1066 = vmatmul.mubr.bf16.gmra.mrb[0].mxu0 %v1007
      %v1067 = vpop.f32.mrb[0].mxu0
      %v1068 = vadd.f32 0.0, %v1067
      %v1069 = vpop.f32.mrb[0].mxu0
      %v1070 = vpop.f32.mrb[0].mxu0
      %v1071 = vadd.f32 0.0, %v1070
      %v1072 = vpop.f32.mrb[0].mxu0
      %1073 = vdwg.mxu0
      %v1074 = vsel %vm345, %v1044, -inf
      %1075 = vmax.xlane.f32.xlu0 %v1074
      %v1076 = vpop.xlane.xlu0 %1075
      %v1077 = vsel %vm345, %v1047, -inf
      %1078 = vmax.xlane.f32.xlu0 %v1077
      %v1079 = vpop.xlane.xlu0 %1078
      %v1080 = vsel %vm345, %v1052, -inf
      %1081 = vmax.xlane.f32.xlu0 %v1080
      %v1082 = vpop.xlane.xlu0 %1081
      %v1083 = vsel %vm345, %v1055, -inf
      %1084 = vmax.xlane.f32.xlu0 %v1083
      %v1085 = vpop.xlane.xlu0 %1084
      %v1086 = vsel %vm345, %v1060, -inf
      %1087 = vmax.xlane.f32.xlu0 %v1086
      %v1088 = vpop.xlane.xlu0 %1087
      %v1089 = vsel %vm345, %v1063, -inf
      %1090 = vmax.xlane.f32.xlu0 %v1089
      %v1091 = vpop.xlane.xlu0 %1090
      %v1092 = vsel %vm345, %v1068, -inf
      %1093 = vmax.xlane.f32.xlu0 %v1092
      %v1094 = vpop.xlane.xlu0 %1093
      %v1095 = vsel %vm345, %v1071, -inf
      %1096 = vmax.xlane.f32.xlu0 %v1095
      %v1097 = vpop.xlane.xlu0 %1096
      %v1098 = vsub.f32 %v1044, %v1076
      %v1099 = vsub.f32 %v1047, %v1079
      %v1100 = vsub.f32 %v1052, %v1082
      %v1101 = vsub.f32 %v1055, %v1085
      %v1102 = vsub.f32 %v1060, %v1088
      %v1103 = vsub.f32 %v1063, %v1091
      %v1104 = vsub.f32 %v1068, %v1094
      %v1105 = vsub.f32 %v1071, %v1097
      %v1106 = vmul.f32 %v1098, 1.442695
      %v1107 = vpow.pop %v1106
      %v1108 = vmul.f32 %v1099, 1.442695
      %v1109 = vpow.pop %v1108
      %v1110 = vmul.f32 %v1100, 1.442695
      %v1111 = vpow.pop %v1110
      %v1112 = vmul.f32 %v1101, 1.442695
      %v1113 = vpow.pop %v1112
      %v1114 = vmul.f32 %v1102, 1.442695
      %v1115 = vpow.pop %v1114
      %v1116 = vmul.f32 %v1103, 1.442695
      %v1117 = vpow.pop %v1116
      %v1118 = vmul.f32 %v1104, 1.442695
      %v1119 = vpow.pop %v1118
      %v1120 = vmul.f32 %v1105, 1.442695
      %v1121 = vpow.pop %v1120
      %v1122 = vsel %vm345, %v1107, 0.0
      %1123 = vadd.xlane.f32.xlu0 %v1122
      %v1124 = vpop.xlane.xlu0 %1123
      %v1125 = vsel %vm345, %v1109, 0.0
      %1126 = vadd.xlane.f32.xlu0 %v1125
      %v1127 = vpop.xlane.xlu0 %1126
      %v1128 = vsel %vm345, %v1111, 0.0
      %1129 = vadd.xlane.f32.xlu0 %v1128
      %v1130 = vpop.xlane.xlu0 %1129
      %v1131 = vsel %vm345, %v1113, 0.0
      %1132 = vadd.xlane.f32.xlu0 %v1131
      %v1133 = vpop.xlane.xlu0 %1132
      %v1134 = vsel %vm345, %v1115, 0.0
      %1135 = vadd.xlane.f32.xlu0 %v1134
      %v1136 = vpop.xlane.xlu0 %1135
      %v1137 = vsel %vm345, %v1117, 0.0
      %1138 = vadd.xlane.f32.xlu0 %v1137
      %v1139 = vpop.xlane.xlu0 %1138
      %v1140 = vsel %vm345, %v1119, 0.0
      %1141 = vadd.xlane.f32.xlu0 %v1140
      %v1142 = vpop.xlane.xlu0 %1141
      %v1143 = vsel %vm345, %v1121, 0.0
      %1144 = vadd.xlane.f32.xlu0 %v1143
      %v1145 = vpop.xlane.xlu0 %1144
      %v1146 = vrcp.pop %v1124
      %v1147 = vrcp.pop %v1127
      %v1148 = vrcp.pop %v1130
      %v1149 = vrcp.pop %v1133
      %v1150 = vrcp.pop %v1136
      %v1151 = vrcp.pop %v1139
      %v1152 = vrcp.pop %v1142
      %v1153 = vrcp.pop %v1145
      %v1154 = vmul.f32 %v1107, %v1146
      %v1155 = vmul.f32 %v1109, %v1147
      %v1156 = vmul.f32 %v1111, %v1148
      %v1157 = vmul.f32 %v1113, %v1149
      %v1158 = vmul.f32 %v1115, %v1150
      %v1159 = vmul.f32 %v1117, %v1151
      %v1160 = vmul.f32 %v1119, %v1152
      %v1161 = vmul.f32 %v1121, %v1153
      %v1162 = vpack.c.bf16 %v948, %v945
      %v1163 = vpack.c.bf16 %v956, %v953
      %v1164 = vpack.c.bf16 %v1155, %v1154
      %v1165 = vpack.c.bf16 %v1157, %v1156
      %v1166 = vpack.c.bf16 %v1159, %v1158
      %v1167 = vpack.c.bf16 %v1161, %v1160
      %v1169 = vsel %vm345, %v1162, 0
      %v1172 = vsel %vm345, %v1163, 0
      %v1175 = vsel %vm345, %v1164, 0
      %v1178 = vsel %vm345, %v1165, 0
      %v1181 = vsel %vm345, %v1166, 0
      %v1184 = vsel %vm345, %v1167, 0
      %1186 = vmatprep.subr.bf16.mxu0 0
      %1187 = vmatpush1.bf16.xpose.msra.mxu0 %v1175
      %1188 = vmatprep.subr.bf16.mxu0 0
      %1189 = vmatpush1.bf16.xpose.msra.mxu0 %v1178
      %1190 = vmatprep.subr.bf16.mxu0 0
      %1191 = vmatpush1.bf16.xpose.msra.mxu0 %v1181
      %1192 = vmatprep.subr.bf16.mxu0 0
      %1193 = vmatpush1.bf16.xpose.msra.mxu0 %v1184
      %1194 = vmatprep.subr.bf16.mxu0 0
      %1195 = vmatpush1.bf16.xpose.msra.mxu0 0
      %1196 = vmatprep.subr.bf16.mxu0 0
      %1197 = vmatpush1.bf16.xpose.msra.mxu0 0
      %1198 = vmatprep.subr.bf16.mxu0 0
      %1199 = vmatpush1.bf16.xpose.msra.mxu0 0
      %1200 = vmatprep.subr.bf16.mxu0 0
      %1201 = vmatpush1.bf16.xpose.msra.mxu0 0
      %1202 = vmatprep.subr.bf16.mxu0 0
      %1203 = vmatpush1.bf16.xpose.msra.mxu0 0
      %1204 = vmatprep.subr.bf16.mxu0 0
      %1205 = vmatpush1.bf16.xpose.msra.mxu0 0
      %1206 = vmatprep.subr.bf16.mxu0 0
      %1207 = vmatpush1.bf16.xpose.msra.mxu0 0
      %1208 = vmatprep.subr.bf16.mxu0 0
      %1209 = vmatpush1.bf16.xpose.msra.mxu0 0
      %1210 = vmatprep.subr.bf16.mxu0 0
      %1211 = vmatpush1.bf16.xpose.msra.mxu0 0
      %1212 = vmatprep.subr.bf16.mxu0 0
      %1213 = vmatpush1.bf16.xpose.msra.mxu0 0
      %1214 = vmatprep.subr.bf16.mxu0 0
      %1215 = vmatpush1.bf16.xpose.msra.mxu0 0
      %1216 = vmatprep.subr.bf16.mxu0 0
      %1217 = vmatpush1.bf16.xpose.msra.mxu0 0
      %1218 = vmatprep.mubr.bf16.mxu0 0
      %1219 = vmatmul.mubr.bf16.gmra.mrb[0].mxu0 %v1169
      %v1220 = vpop.f32.mrb[0].mxu0
      %v1221 = vadd.f32 0.0, %v1220
      %v1222 = vpop.f32.mrb[0].mxu0
      %v1223 = vpop.f32.mrb[0].mxu0
      %v1224 = vadd.f32 0.0, %v1223
      %v1225 = vpop.f32.mrb[0].mxu0
      %1226 = vmatprep.mubr.bf16.mxu0 0
      %1227 = vmatmul.mubr.bf16.gmra.mrb[0].mxu0 %v1172
      %v1228 = vpop.f32.mrb[0].mxu0
      %v1229 = vadd.f32 0.0, %v1228
      %v1230 = vpop.f32.mrb[0].mxu0
      %v1231 = vpop.f32.mrb[0].mxu0
      %v1232 = vadd.f32 0.0, %v1231
      %v1233 = vpop.f32.mrb[0].mxu0
      %1234 = vdwg.mxu0
      %v1235 = vld [vmem:[%s4] sm:$0xf]
      %v1236 = vld [vmem:[%s4 + $0x4] sm:$0xf]
      %v1237 = vld [vmem:[%s4 + $0x8] sm:$0xf]
      %v1238 = vld [vmem:[%s4 + $0xc] sm:$0xf]
      %v1239 = vpack.c.bf16 %v1224, %v1221
      %v1240 = vpack.c.bf16 %v1232, %v1229
      %1241 = vset.pattern.permute.xlu0 8
      %1242 = vperm.xlu0 %1241, %v647
      %v1243 = vpop.permute.xlu0 %1242
      %1245 = vset.pattern.permute.xlu0 8
      %1246 = vperm.xlu0 %1245, %v648
      %v1247 = vpop.permute.xlu0 %1246
      %1249 = vset.pattern.permute.xlu0 8
      %1250 = vperm.xlu0 %1249, %v649
      %v1251 = vpop.permute.xlu0 %1250
      %1253 = vset.pattern.permute.xlu0 8
      %1254 = vperm.xlu0 %1253, %v650
      %v1255 = vpop.permute.xlu0 %1254
      %v1261 = vunpack.c.l.b16 %v1235
      %v1262 = vunpack.c.l.b16 %v1236
      %v1263 = vunpack.c.l.b16 %v1237
      %v1264 = vunpack.c.l.b16 %v1238
      %v1265 = vpack.c.b16 %v1262, %v1261
      %v1266 = vpack.c.b16 %v1264, %v1263
      %v1268 = vsel %vm859, %v1265, 0
      %v1271 = vsel %vm859, %v1266, 0
      %1273 = vmatprep.subr.bf16.mxu0 0
      %1274 = vmatpush1.bf16.msra.mxu0 %v1239
      %1275 = vmatprep.subr.bf16.mxu0 0
      %1276 = vmatpush1.bf16.msra.mxu0 %v1240
      %1277 = vmatprep.subr.bf16.mxu0 0
      %1278 = vmatpush1.bf16.msra.mxu0 0
      %1279 = vmatprep.subr.bf16.mxu0 0
      %1280 = vmatpush1.bf16.msra.mxu0 0
      %1281 = vmatprep.subr.bf16.mxu0 0
      %1282 = vmatpush1.bf16.msra.mxu0 0
      %1283 = vmatprep.subr.bf16.mxu0 0
      %1284 = vmatpush1.bf16.msra.mxu0 0
      %1285 = vmatprep.subr.bf16.mxu0 0
      %1286 = vmatpush1.bf16.msra.mxu0 0
      %1287 = vmatprep.subr.bf16.mxu0 0
      %1288 = vmatpush1.bf16.msra.mxu0 0
      %1289 = vmatprep.subr.bf16.mxu0 0
      %1290 = vmatpush1.bf16.msra.mxu0 0
      %1291 = vmatprep.subr.bf16.mxu0 0
      %1292 = vmatpush1.bf16.msra.mxu0 0
      %1293 = vmatprep.subr.bf16.mxu0 0
      %1294 = vmatpush1.bf16.msra.mxu0 0
      %1295 = vmatprep.subr.bf16.mxu0 0
      %1296 = vmatpush1.bf16.msra.mxu0 0
      %1297 = vmatprep.subr.bf16.mxu0 0
      %1298 = vmatpush1.bf16.msra.mxu0 0
      %1299 = vmatprep.subr.bf16.mxu0 0
      %1300 = vmatpush1.bf16.msra.mxu0 0
      %1301 = vmatprep.subr.bf16.mxu0 0
      %1302 = vmatpush1.bf16.msra.mxu0 0
      %1303 = vmatprep.subr.bf16.mxu0 0
      %1304 = vmatpush1.bf16.msra.mxu0 0
      %1305 = vmatprep.mubr.bf16.mxu0 0
      %1306 = vmatmul.mubr.bf16.gmra.mrb[0].mxu0 %v1268
      %v1307 = vpop.f32.mrb[0].mxu0
      %v1308 = vadd.f32 %v1243, %v1307
      %v1309 = vpop.f32.mrb[0].mxu0
      %v1310 = vpop.f32.mrb[0].mxu0
      %v1311 = vadd.f32 %v1247, %v1310
      %v1312 = vpop.f32.mrb[0].mxu0
      %1313 = vmatprep.mubr.bf16.mxu0 0
      %1314 = vmatmul.mubr.bf16.gmra.mrb[0].mxu0 %v1271
      %v1315 = vpop.f32.mrb[0].mxu0
      %v1316 = vadd.f32 %v1251, %v1315
      %v1317 = vpop.f32.mrb[0].mxu0
      %v1318 = vpop.f32.mrb[0].mxu0
      %v1319 = vadd.f32 %v1255, %v1318
      %v1320 = vpop.f32.mrb[0].mxu0
      %1321 = vdwg.mxu0
      %1322 = vset.pattern.permute.xlu0 3
      %1323 = vperm.xlu0 %1322, %v647
      %v1324 = vpop.permute.xlu0 %1323
      %1326 = vset.pattern.permute.xlu0 3
      %1327 = vperm.xlu0 %1326, %v648
      %v1328 = vpop.permute.xlu0 %1327
      %1330 = vset.pattern.permute.xlu0 3
      %1331 = vperm.xlu0 %1330, %v649
      %v1332 = vpop.permute.xlu0 %1331
      %1334 = vset.pattern.permute.xlu0 3
      %1335 = vperm.xlu0 %1334, %v650
      %v1336 = vpop.permute.xlu0 %1335
      %v1338 = vmul.f32 %v1324, %v551
      %v1339 = vmul.f32 %v1328, %v554
      %v1340 = vmul.f32 %v1332, %v559
      %v1341 = vmul.f32 %v1336, %v562
      %1342 = vset.pattern.permute.xlu0 4
      %1343 = vperm.xlu0 %1342, %v647
      %v1344 = vpop.permute.xlu0 %1343
      %1346 = vset.pattern.permute.xlu0 4
      %1347 = vperm.xlu0 %1346, %v648
      %v1348 = vpop.permute.xlu0 %1347
      %1350 = vset.pattern.permute.xlu0 4
      %1351 = vperm.xlu0 %1350, %v649
      %v1352 = vpop.permute.xlu0 %1351
      %1354 = vset.pattern.permute.xlu0 4
      %1355 = vperm.xlu0 %1354, %v650
      %v1356 = vpop.permute.xlu0 %1355
      %v1358 = vmul.f32 %v1344, %v307
      %v1359 = vmul.f32 %v1348, %v308
      %v1360 = vmul.f32 %v1352, %v309
      %v1361 = vmul.f32 %v1356, %v310
      %v1362 = vadd.f32 %v1338, %v1358
      %v1363 = vadd.f32 %v1339, %v1359
      %v1364 = vadd.f32 %v1340, %v1360
      %v1365 = vadd.f32 %v1341, %v1361
      %1366 = vset.pattern.permute.xlu0 5
      %1367 = vperm.xlu0 %1366, %v647
      %v1368 = vpop.permute.xlu0 %1367
      %1370 = vset.pattern.permute.xlu0 5
      %1371 = vperm.xlu0 %1370, %v648
      %v1372 = vpop.permute.xlu0 %1371
      %1374 = vset.pattern.permute.xlu0 5
      %1375 = vperm.xlu0 %1374, %v649
      %v1376 = vpop.permute.xlu0 %1375
      %1378 = vset.pattern.permute.xlu0 5
      %1379 = vperm.xlu0 %1378, %v650
      %v1380 = vpop.permute.xlu0 %1379
      %v1382 = vmul.f32 %v1368, %v633
      %v1383 = vmul.f32 %v1372, %v636
      %v1384 = vmul.f32 %v1376, %v641
      %v1385 = vmul.f32 %v1380, %v644
      %v1386 = vadd.f32 %v1362, %v1382
      %v1387 = vadd.f32 %v1363, %v1383
      %v1388 = vadd.f32 %v1364, %v1384
      %v1389 = vadd.f32 %v1365, %v1385
      %1390 = vset.pattern.permute.xlu0 7
      %1391 = vperm.xlu0 %1390, %v647
      %v1392 = vpop.permute.xlu0 %1391
      %1394 = vset.pattern.permute.xlu0 7
      %1395 = vperm.xlu0 %1394, %v648
      %v1396 = vpop.permute.xlu0 %1395
      %1398 = vset.pattern.permute.xlu0 7
      %1399 = vperm.xlu0 %1398, %v649
      %v1400 = vpop.permute.xlu0 %1399
      %1402 = vset.pattern.permute.xlu0 7
      %1403 = vperm.xlu0 %1402, %v650
      %v1404 = vpop.permute.xlu0 %1403
      %v1406 = vadd.f32 %v1386, %v1392
      %v1407 = vadd.f32 %v1387, %v1396
      %v1408 = vadd.f32 %v1388, %v1400
      %v1409 = vadd.f32 %v1389, %v1404
      %s1410 = scalar_lea.vmem %s2, 48
      %v1411 = vld [vmem:[%s1410] sm:$0xf]
      %v1412 = vld [vmem:[%s1410 + $0x4] sm:$0xf]
      %v1413 = vld [vmem:[%s1410 + $0x8] sm:$0xf]
      %v1414 = vld [vmem:[%s1410 + $0xc] sm:$0xf]
      %v1415 = vld [vmem:[%s1410 + $0x10] sm:$0xf]
      %v1416 = vld [vmem:[%s1410 + $0x14] sm:$0xf]
      %v1417 = vld [vmem:[%s1410 + $0x18] sm:$0xf]
      %v1418 = vld [vmem:[%s1410 + $0x1c] sm:$0xf]
      %v1419 = vld [vmem:[%s1410 + $0x20] sm:$0xf]
      %v1420 = vld [vmem:[%s1410 + $0x24] sm:$0xf]
      %v1421 = vld [vmem:[%s1410 + $0x28] sm:$0xf]
      %v1422 = vld [vmem:[%s1410 + $0x2c] sm:$0xf]
      %v1423 = vpack.c.bf16 %v1407, %v1406
      %v1424 = vpack.c.bf16 %v1409, %v1408
      %1425 = vset.pattern.permute.xlu0 1
      %1426 = vperm.xlu0 %1425, %v757
      %v1427 = vpop.permute.xlu0 %1426
      %1429 = vset.pattern.permute.xlu0 1
      %1430 = vperm.xlu0 %1429, %v758
      %v1431 = vpop.permute.xlu0 %1430
      %1433 = vset.pattern.permute.xlu0 1
      %1434 = vperm.xlu0 %1433, %v759
      %v1435 = vpop.permute.xlu0 %1434
      %1437 = vset.pattern.permute.xlu0 1
      %1438 = vperm.xlu0 %1437, %v760
      %v1439 = vpop.permute.xlu0 %1438
      %1441 = vset.pattern.permute.xlu0 1
      %1442 = vperm.xlu0 %1441, %v761
      %v1443 = vpop.permute.xlu0 %1442
      %1445 = vset.pattern.permute.xlu0 1
      %1446 = vperm.xlu0 %1445, %v762
      %v1447 = vpop.permute.xlu0 %1446
      %1449 = vset.pattern.permute.xlu0 1
      %1450 = vperm.xlu0 %1449, %v763
      %v1451 = vpop.permute.xlu0 %1450
      %1453 = vset.pattern.permute.xlu0 1
      %1454 = vperm.xlu0 %1453, %v764
      %v1455 = vpop.permute.xlu0 %1454
      %1457 = vset.pattern.permute.xlu0 1
      %1458 = vperm.xlu0 %1457, %v765
      %v1459 = vpop.permute.xlu0 %1458
      %1461 = vset.pattern.permute.xlu0 1
      %1462 = vperm.xlu0 %1461, %v766
      %v1463 = vpop.permute.xlu0 %1462
      %1465 = vset.pattern.permute.xlu0 1
      %1466 = vperm.xlu0 %1465, %v767
      %v1467 = vpop.permute.xlu0 %1466
      %1469 = vset.pattern.permute.xlu0 1
      %1470 = vperm.xlu0 %1469, %v768
      %v1471 = vpop.permute.xlu0 %1470
      %v1485 = vunpack.c.l.b16 %v1411
      %v1486 = vunpack.c.l.b16 %v1412
      %v1487 = vunpack.c.l.b16 %v1413
      %v1488 = vunpack.c.l.b16 %v1414
      %v1489 = vunpack.c.l.b16 %v1415
      %v1490 = vunpack.c.l.b16 %v1416
      %v1491 = vunpack.c.l.b16 %v1417
      %v1492 = vunpack.c.l.b16 %v1418
      %v1493 = vunpack.c.l.b16 %v1419
      %v1494 = vunpack.c.l.b16 %v1420
      %v1495 = vunpack.c.l.b16 %v1421
      %v1496 = vunpack.c.l.b16 %v1422
      %v1497 = vpack.c.b16 %v1486, %v1485
      %v1498 = vpack.c.b16 %v1488, %v1487
      %v1499 = vpack.c.b16 %v1490, %v1489
      %v1500 = vpack.c.b16 %v1492, %v1491
      %v1501 = vpack.c.b16 %v1494, %v1493
      %v1502 = vpack.c.b16 %v1496, %v1495
      %v1504 = vsel %vm859, %v1497, 0
      %v1507 = vsel %vm859, %v1498, 0
      %v1510 = vsel %vm859, %v1499, 0
      %v1513 = vsel %vm859, %v1500, 0
      %v1516 = vsel %vm859, %v1501, 0
      %v1519 = vsel %vm859, %v1502, 0
      %1521 = vmatprep.subr.bf16.mxu0 0
      %1522 = vmatpush1.bf16.msra.mxu0 %v1423
      %1523 = vmatprep.subr.bf16.mxu0 0
      %1524 = vmatpush1.bf16.msra.mxu0 %v1424
      %1525 = vmatprep.subr.bf16.mxu0 0
      %1526 = vmatpush1.bf16.msra.mxu0 0
      %1527 = vmatprep.subr.bf16.mxu0 0
      %1528 = vmatpush1.bf16.msra.mxu0 0
      %1529 = vmatprep.subr.bf16.mxu0 0
      %1530 = vmatpush1.bf16.msra.mxu0 0
      %1531 = vmatprep.subr.bf16.mxu0 0
      %1532 = vmatpush1.bf16.msra.mxu0 0
      %1533 = vmatprep.subr.bf16.mxu0 0
      %1534 = vmatpush1.bf16.msra.mxu0 0
      %1535 = vmatprep.subr.bf16.mxu0 0
      %1536 = vmatpush1.bf16.msra.mxu0 0
      %1537 = vmatprep.subr.bf16.mxu0 0
      %1538 = vmatpush1.bf16.msra.mxu0 0
      %1539 = vmatprep.subr.bf16.mxu0 0
      %1540 = vmatpush1.bf16.msra.mxu0 0
      %1541 = vmatprep.subr.bf16.mxu0 0
      %1542 = vmatpush1.bf16.msra.mxu0 0
      %1543 = vmatprep.subr.bf16.mxu0 0
      %1544 = vmatpush1.bf16.msra.mxu0 0
      %1545 = vmatprep.subr.bf16.mxu0 0
      %1546 = vmatpush1.bf16.msra.mxu0 0
      %1547 = vmatprep.subr.bf16.mxu0 0
      %1548 = vmatpush1.bf16.msra.mxu0 0
      %1549 = vmatprep.subr.bf16.mxu0 0
      %1550 = vmatpush1.bf16.msra.mxu0 0
      %1551 = vmatprep.subr.bf16.mxu0 0
      %1552 = vmatpush1.bf16.msra.mxu0 0
      %1553 = vmatprep.mubr.bf16.mxu0 0
      %1554 = vmatmul.mubr.bf16.gmra.mrb[0].mxu0 %v1504
      %v1555 = vpop.f32.mrb[0].mxu0
      %v1556 = vadd.f32 %v1427, %v1555
      %v1557 = vpop.f32.mrb[0].mxu0
      %v1558 = vpop.f32.mrb[0].mxu0
      %v1559 = vadd.f32 %v1431, %v1558
      %v1560 = vpop.f32.mrb[0].mxu0
      %1561 = vmatprep.mubr.bf16.mxu0 0
      %1562 = vmatmul.mubr.bf16.gmra.mrb[0].mxu0 %v1507
      %v1563 = vpop.f32.mrb[0].mxu0
      %v1564 = vadd.f32 %v1435, %v1563
      %v1565 = vpop.f32.mrb[0].mxu0
      %v1566 = vpop.f32.mrb[0].mxu0
      %v1567 = vadd.f32 %v1439, %v1566
      %v1568 = vpop.f32.mrb[0].mxu0
      %1569 = vmatprep.mubr.bf16.mxu0 0
      %1570 = vmatmul.mubr.bf16.gmra.mrb[0].mxu0 %v1510
      %v1571 = vpop.f32.mrb[0].mxu0
      %v1572 = vadd.f32 %v1443, %v1571
      %v1573 = vpop.f32.mrb[0].mxu0
      %v1574 = vpop.f32.mrb[0].mxu0
      %v1575 = vadd.f32 %v1447, %v1574
      %v1576 = vpop.f32.mrb[0].mxu0
      %1577 = vmatprep.mubr.bf16.mxu0 0
      %1578 = vmatmul.mubr.bf16.gmra.mrb[0].mxu0 %v1513
      %v1579 = vpop.f32.mrb[0].mxu0
      %v1580 = vadd.f32 %v1451, %v1579
      %v1581 = vpop.f32.mrb[0].mxu0
      %v1582 = vpop.f32.mrb[0].mxu0
      %v1583 = vadd.f32 %v1455, %v1582
      %v1584 = vpop.f32.mrb[0].mxu0
      %1585 = vmatprep.mubr.bf16.mxu0 0
      %1586 = vmatmul.mubr.bf16.gmra.mrb[0].mxu0 %v1516
      %v1587 = vpop.f32.mrb[0].mxu0
      %v1588 = vadd.f32 %v1459, %v1587
      %v1589 = vpop.f32.mrb[0].mxu0
      %v1590 = vpop.f32.mrb[0].mxu0
      %v1591 = vadd.f32 %v1463, %v1590
      %v1592 = vpop.f32.mrb[0].mxu0
      %1593 = vmatprep.mubr.bf16.mxu0 0
      %1594 = vmatmul.mubr.bf16.gmra.mrb[0].mxu0 %v1519
      %v1595 = vpop.f32.mrb[0].mxu0
      %v1596 = vadd.f32 %v1467, %v1595
      %v1597 = vpop.f32.mrb[0].mxu0
      %v1598 = vpop.f32.mrb[0].mxu0
      %v1599 = vadd.f32 %v1471, %v1598
      %v1600 = vpop.f32.mrb[0].mxu0
      %1601 = vdwg.mxu0
      %1602 = vxpose.xlu0.b32.start [1/16] %v1556, 128
      %1603 = vxpose.xlu0.b32.cont [2/16] %v1559, 128
      %1604 = vxpose.xlu0.b32.cont [3/16] %v1564, 128
      %1605 = vxpose.xlu0.b32.cont [4/16] %v1567, 128
      %1606 = vxpose.xlu0.b32.cont [5/16] 0.0, 128
      %1607 = vxpose.xlu0.b32.cont [6/16] 0.0, 128
      %1608 = vxpose.xlu0.b32.cont [7/16] 0.0, 128
      %1609 = vxpose.xlu0.b32.cont [8/16] 0.0, 128
      %1610 = vxpose.xlu0.b32.cont [9/16] 0.0, 128
      %1611 = vxpose.xlu0.b32.cont [10/16] 0.0, 128
      %1612 = vxpose.xlu0.b32.cont [11/16] 0.0, 128
      %1613 = vxpose.xlu0.b32.cont [12/16] 0.0, 128
      %1614 = vxpose.xlu0.b32.cont [13/16] 0.0, 128
      %1615 = vxpose.xlu0.b32.cont [14/16] 0.0, 128
      %1616 = vxpose.xlu0.b32.cont [15/16] 0.0, 128
      %1617 = vxpose.xlu0.b32.end [16/16] 0.0, 128
      %v1618 = vpop.trf.xlu0
      %v1619 = vpop.trf.xlu0
      %v1620 = vpop.trf.xlu0
      %v1621 = vpop.trf.xlu0
      %v1622 = vpop.trf.xlu0
      %v1623 = vpop.trf.xlu0
      %v1624 = vpop.trf.xlu0
      %v1625 = vpop.trf.xlu0
      %v1626 = vpop.trf.xlu0
      %v1627 = vpop.trf.xlu0
      %v1628 = vpop.trf.xlu0
      %v1629 = vpop.trf.xlu0
      %v1630 = vpop.trf.xlu0
      %v1631 = vpop.trf.xlu0
      %v1632 = vpop.trf.xlu0
      %v1633 = vpop.trf.xlu0
      %v1634 = vpack.c.bf16 %v1619, %v1618
      %v1635 = vpack.c.bf16 %v1621, %v1620
      %v1636 = vpack.c.bf16 %v1623, %v1622
      %v1637 = vpack.c.bf16 %v1625, %v1624
      %v1638 = vpack.c.bf16 %v1575, %v1572
      %v1639 = vpack.c.bf16 %v1583, %v1580
      %v1641 = vsel %vm859, %v1634, 0
      %v1644 = vsel %vm859, %v1635, 0
      %v1647 = vsel %vm859, %v1636, 0
      %v1650 = vsel %vm859, %v1637, 0
      %1652 = vmatprep.subr.bf16.mxu0 0
      %1653 = vmatpush1.bf16.msra.mxu0 %v1638
      %1654 = vmatprep.subr.bf16.mxu0 0
      %1655 = vmatpush1.bf16.msra.mxu0 %v1639
      %1656 = vmatprep.subr.bf16.mxu0 0
      %1657 = vmatpush1.bf16.msra.mxu0 0
      %1658 = vmatprep.subr.bf16.mxu0 0
      %1659 = vmatpush1.bf16.msra.mxu0 0
      %1660 = vmatprep.subr.bf16.mxu0 0
      %1661 = vmatpush1.bf16.msra.mxu0 0
      %1662 = vmatprep.subr.bf16.mxu0 0
      %1663 = vmatpush1.bf16.msra.mxu0 0
      %1664 = vmatprep.subr.bf16.mxu0 0
      %1665 = vmatpush1.bf16.msra.mxu0 0
      %1666 = vmatprep.subr.bf16.mxu0 0
      %1667 = vmatpush1.bf16.msra.mxu0 0
      %1668 = vmatprep.subr.bf16.mxu0 0
      %1669 = vmatpush1.bf16.msra.mxu0 0
      %1670 = vmatprep.subr.bf16.mxu0 0
      %1671 = vmatpush1.bf16.msra.mxu0 0
      %1672 = vmatprep.subr.bf16.mxu0 0
      %1673 = vmatpush1.bf16.msra.mxu0 0
      %1674 = vmatprep.subr.bf16.mxu0 0
      %1675 = vmatpush1.bf16.msra.mxu0 0
      %1676 = vmatprep.subr.bf16.mxu0 0
      %1677 = vmatpush1.bf16.msra.mxu0 0
      %1678 = vmatprep.subr.bf16.mxu0 0
      %1679 = vmatpush1.bf16.msra.mxu0 0
      %1680 = vmatprep.subr.bf16.mxu0 0
      %1681 = vmatpush1.bf16.msra.mxu0 0
      %1682 = vmatprep.subr.bf16.mxu0 0
      %1683 = vmatpush1.bf16.msra.mxu0 0
      %1684 = vmatprep.mubr.bf16.mxu0 0
      %1685 = vmatmul.mubr.bf16.gmra.mrb[0].mxu0 %v1641
      %v1686 = vpop.f32.mrb[0].mxu0
      %v1687 = vadd.f32 0.0, %v1686
      %v1688 = vpop.f32.mrb[0].mxu0
      %v1689 = vpop.f32.mrb[0].mxu0
      %v1690 = vadd.f32 0.0, %v1689
      %v1691 = vpop.f32.mrb[0].mxu0
      %1692 = vmatprep.mubr.bf16.mxu0 0
      %1693 = vmatmul.mubr.bf16.gmra.mrb[0].mxu0 %v1644
      %v1694 = vpop.f32.mrb[0].mxu0
      %v1695 = vadd.f32 0.0, %v1694
      %v1696 = vpop.f32.mrb[0].mxu0
      %v1697 = vpop.f32.mrb[0].mxu0
      %v1698 = vadd.f32 0.0, %v1697
      %v1699 = vpop.f32.mrb[0].mxu0
      %1700 = vmatprep.mubr.bf16.mxu0 0
      %1701 = vmatmul.mubr.bf16.gmra.mrb[0].mxu0 %v1647
      %v1702 = vpop.f32.mrb[0].mxu0
      %v1703 = vadd.f32 0.0, %v1702
      %v1704 = vpop.f32.mrb[0].mxu0
      %v1705 = vpop.f32.mrb[0].mxu0
      %v1706 = vadd.f32 0.0, %v1705
      %v1707 = vpop.f32.mrb[0].mxu0
      %1708 = vmatprep.mubr.bf16.mxu0 0
      %1709 = vmatmul.mubr.bf16.gmra.mrb[0].mxu0 %v1650
      %v1710 = vpop.f32.mrb[0].mxu0
      %v1711 = vadd.f32 0.0, %v1710
      %v1712 = vpop.f32.mrb[0].mxu0
      %v1713 = vpop.f32.mrb[0].mxu0
      %v1714 = vadd.f32 0.0, %v1713
      %v1715 = vpop.f32.mrb[0].mxu0
      %1716 = vdwg.mxu0
      %v1717 = vsel %vm345, %v1687, -inf
      %1718 = vmax.xlane.f32.xlu0 %v1717
      %v1719 = vpop.xlane.xlu0 %1718
      %v1720 = vsel %vm345, %v1690, -inf
      %1721 = vmax.xlane.f32.xlu0 %v1720
      %v1722 = vpop.xlane.xlu0 %1721
      %v1723 = vsel %vm345, %v1695, -inf
      %1724 = vmax.xlane.f32.xlu0 %v1723
      %v1725 = vpop.xlane.xlu0 %1724
      %v1726 = vsel %vm345, %v1698, -inf
      %1727 = vmax.xlane.f32.xlu0 %v1726
      %v1728 = vpop.xlane.xlu0 %1727
      %v1729 = vsel %vm345, %v1703, -inf
      %1730 = vmax.xlane.f32.xlu0 %v1729
      %v1731 = vpop.xlane.xlu0 %1730
      %v1732 = vsel %vm345, %v1706, -inf
      %1733 = vmax.xlane.f32.xlu0 %v1732
      %v1734 = vpop.xlane.xlu0 %1733
      %v1735 = vsel %vm345, %v1711, -inf
      %1736 = vmax.xlane.f32.xlu0 %v1735
      %v1737 = vpop.xlane.xlu0 %1736
      %v1738 = vsel %vm345, %v1714, -inf
      %1739 = vmax.xlane.f32.xlu0 %v1738
      %v1740 = vpop.xlane.xlu0 %1739
      %v1741 = vsub.f32 %v1687, %v1719
      %v1742 = vsub.f32 %v1690, %v1722
      %v1743 = vsub.f32 %v1695, %v1725
      %v1744 = vsub.f32 %v1698, %v1728
      %v1745 = vsub.f32 %v1703, %v1731
      %v1746 = vsub.f32 %v1706, %v1734
      %v1747 = vsub.f32 %v1711, %v1737
      %v1748 = vsub.f32 %v1714, %v1740
      %v1749 = vmul.f32 %v1741, 1.442695
      %v1750 = vpow.pop %v1749
      %v1751 = vmul.f32 %v1742, 1.442695
      %v1752 = vpow.pop %v1751
      %v1753 = vmul.f32 %v1743, 1.442695
      %v1754 = vpow.pop %v1753
      %v1755 = vmul.f32 %v1744, 1.442695
      %v1756 = vpow.pop %v1755
      %v1757 = vmul.f32 %v1745, 1.442695
      %v1758 = vpow.pop %v1757
      %v1759 = vmul.f32 %v1746, 1.442695
      %v1760 = vpow.pop %v1759
      %v1761 = vmul.f32 %v1747, 1.442695
      %v1762 = vpow.pop %v1761
      %v1763 = vmul.f32 %v1748, 1.442695
      %v1764 = vpow.pop %v1763
      %v1765 = vsel %vm345, %v1750, 0.0
      %1766 = vadd.xlane.f32.xlu0 %v1765
      %v1767 = vpop.xlane.xlu0 %1766
      %v1768 = vsel %vm345, %v1752, 0.0
      %1769 = vadd.xlane.f32.xlu0 %v1768
      %v1770 = vpop.xlane.xlu0 %1769
      %v1771 = vsel %vm345, %v1754, 0.0
      %1772 = vadd.xlane.f32.xlu0 %v1771
      %v1773 = vpop.xlane.xlu0 %1772
      %v1774 = vsel %vm345, %v1756, 0.0
      %1775 = vadd.xlane.f32.xlu0 %v1774
      %v1776 = vpop.xlane.xlu0 %1775
      %v1777 = vsel %vm345, %v1758, 0.0
      %1778 = vadd.xlane.f32.xlu0 %v1777
      %v1779 = vpop.xlane.xlu0 %1778
      %v1780 = vsel %vm345, %v1760, 0.0
      %1781 = vadd.xlane.f32.xlu0 %v1780
      %v1782 = vpop.xlane.xlu0 %1781
      %v1783 = vsel %vm345, %v1762, 0.0
      %1784 = vadd.xlane.f32.xlu0 %v1783
      %v1785 = vpop.xlane.xlu0 %1784
      %v1786 = vsel %vm345, %v1764, 0.0
      %1787 = vadd.xlane.f32.xlu0 %v1786
      %v1788 = vpop.xlane.xlu0 %1787
      %v1789 = vrcp.pop %v1767
      %v1790 = vrcp.pop %v1770
      %v1791 = vrcp.pop %v1773
      %v1792 = vrcp.pop %v1776
      %v1793 = vrcp.pop %v1779
      %v1794 = vrcp.pop %v1782
      %v1795 = vrcp.pop %v1785
      %v1796 = vrcp.pop %v1788
      %v1797 = vmul.f32 %v1750, %v1789
      %v1798 = vmul.f32 %v1752, %v1790
      %v1799 = vmul.f32 %v1754, %v1791
      %v1800 = vmul.f32 %v1756, %v1792
      %v1801 = vmul.f32 %v1758, %v1793
      %v1802 = vmul.f32 %v1760, %v1794
      %v1803 = vmul.f32 %v1762, %v1795
      %v1804 = vmul.f32 %v1764, %v1796
      %v1805 = vpack.c.bf16 %v1591, %v1588
      %v1806 = vpack.c.bf16 %v1599, %v1596
      %v1807 = vpack.c.bf16 %v1798, %v1797
      %v1808 = vpack.c.bf16 %v1800, %v1799
      %v1809 = vpack.c.bf16 %v1802, %v1801
      %v1810 = vpack.c.bf16 %v1804, %v1803
      %v1812 = vsel %vm345, %v1805, 0
      %v1815 = vsel %vm345, %v1806, 0
      %v1818 = vsel %vm345, %v1807, 0
      %v1821 = vsel %vm345, %v1808, 0
      %v1824 = vsel %vm345, %v1809, 0
      %v1827 = vsel %vm345, %v1810, 0
      %1829 = vmatprep.subr.bf16.mxu0 0
      %1830 = vmatpush1.bf16.xpose.msra.mxu0 %v1818
      %1831 = vmatprep.subr.bf16.mxu0 0
      %1832 = vmatpush1.bf16.xpose.msra.mxu0 %v1821
      %1833 = vmatprep.subr.bf16.mxu0 0
      %1834 = vmatpush1.bf16.xpose.msra.mxu0 %v1824
      %1835 = vmatprep.subr.bf16.mxu0 0
      %1836 = vmatpush1.bf16.xpose.msra.mxu0 %v1827
      %1837 = vmatprep.subr.bf16.mxu0 0
      %1838 = vmatpush1.bf16.xpose.msra.mxu0 0
      %1839 = vmatprep.subr.bf16.mxu0 0
      %1840 = vmatpush1.bf16.xpose.msra.mxu0 0
      %1841 = vmatprep.subr.bf16.mxu0 0
      %1842 = vmatpush1.bf16.xpose.msra.mxu0 0
      %1843 = vmatprep.subr.bf16.mxu0 0
      %1844 = vmatpush1.bf16.xpose.msra.mxu0 0
      %1845 = vmatprep.subr.bf16.mxu0 0
      %1846 = vmatpush1.bf16.xpose.msra.mxu0 0
      %1847 = vmatprep.subr.bf16.mxu0 0
      %1848 = vmatpush1.bf16.xpose.msra.mxu0 0
      %1849 = vmatprep.subr.bf16.mxu0 0
      %1850 = vmatpush1.bf16.xpose.msra.mxu0 0
      %1851 = vmatprep.subr.bf16.mxu0 0
      %1852 = vmatpush1.bf16.xpose.msra.mxu0 0
      %1853 = vmatprep.subr.bf16.mxu0 0
      %1854 = vmatpush1.bf16.xpose.msra.mxu0 0
      %1855 = vmatprep.subr.bf16.mxu0 0
      %1856 = vmatpush1.bf16.xpose.msra.mxu0 0
      %1857 = vmatprep.subr.bf16.mxu0 0
      %1858 = vmatpush1.bf16.xpose.msra.mxu0 0
      %1859 = vmatprep.subr.bf16.mxu0 0
      %1860 = vmatpush1.bf16.xpose.msra.mxu0 0
      %1861 = vmatprep.mubr.bf16.mxu0 0
      %1862 = vmatmul.mubr.bf16.gmra.mrb[0].mxu0 %v1812
      %v1863 = vpop.f32.mrb[0].mxu0
      %v1864 = vadd.f32 0.0, %v1863
      %v1865 = vpop.f32.mrb[0].mxu0
      %v1866 = vpop.f32.mrb[0].mxu0
      %v1867 = vadd.f32 0.0, %v1866
      %v1868 = vpop.f32.mrb[0].mxu0
      %1869 = vmatprep.mubr.bf16.mxu0 0
      %1870 = vmatmul.mubr.bf16.gmra.mrb[0].mxu0 %v1815
      %v1871 = vpop.f32.mrb[0].mxu0
      %v1872 = vadd.f32 0.0, %v1871
      %v1873 = vpop.f32.mrb[0].mxu0
      %v1874 = vpop.f32.mrb[0].mxu0
      %v1875 = vadd.f32 0.0, %v1874
      %v1876 = vpop.f32.mrb[0].mxu0
      %1877 = vdwg.mxu0
      %s1878 = scalar_lea.vmem %s4, 16
      %v1879 = vld [vmem:[%s1878] sm:$0xf]
      %v1880 = vld [vmem:[%s1878 + $0x4] sm:$0xf]
      %v1881 = vld [vmem:[%s1878 + $0x8] sm:$0xf]
      %v1882 = vld [vmem:[%s1878 + $0xc] sm:$0xf]
      %v1883 = vpack.c.bf16 %v1867, %v1864
      %v1884 = vpack.c.bf16 %v1875, %v1872
      %1885 = vset.pattern.permute.xlu0 9
      %1886 = vperm.xlu0 %1885, %v647
      %v1887 = vpop.permute.xlu0 %1886
      %1889 = vset.pattern.permute.xlu0 9
      %1890 = vperm.xlu0 %1889, %v648
      %v1891 = vpop.permute.xlu0 %1890
      %1893 = vset.pattern.permute.xlu0 9
      %1894 = vperm.xlu0 %1893, %v649
      %v1895 = vpop.permute.xlu0 %1894
      %1897 = vset.pattern.permute.xlu0 9
      %1898 = vperm.xlu0 %1897, %v650
      %v1899 = vpop.permute.xlu0 %1898
      %v1905 = vunpack.c.l.b16 %v1879
      %v1906 = vunpack.c.l.b16 %v1880
      %v1907 = vunpack.c.l.b16 %v1881
      %v1908 = vunpack.c.l.b16 %v1882
      %v1909 = vpack.c.b16 %v1906, %v1905
      %v1910 = vpack.c.b16 %v1908, %v1907
      %v1912 = vsel %vm859, %v1909, 0
      %v1915 = vsel %vm859, %v1910, 0
      %1917 = vmatprep.subr.bf16.mxu0 0
      %1918 = vmatpush1.bf16.msra.mxu0 %v1883
      %1919 = vmatprep.subr.bf16.mxu0 0
      %1920 = vmatpush1.bf16.msra.mxu0 %v1884
      %1921 = vmatprep.subr.bf16.mxu0 0
      %1922 = vmatpush1.bf16.msra.mxu0 0
      %1923 = vmatprep.subr.bf16.mxu0 0
      %1924 = vmatpush1.bf16.msra.mxu0 0
      %1925 = vmatprep.subr.bf16.mxu0 0
      %1926 = vmatpush1.bf16.msra.mxu0 0
      %1927 = vmatprep.subr.bf16.mxu0 0
      %1928 = vmatpush1.bf16.msra.mxu0 0
      %1929 = vmatprep.subr.bf16.mxu0 0
      %1930 = vmatpush1.bf16.msra.mxu0 0
      %1931 = vmatprep.subr.bf16.mxu0 0
      %1932 = vmatpush1.bf16.msra.mxu0 0
      %1933 = vmatprep.subr.bf16.mxu0 0
      %1934 = vmatpush1.bf16.msra.mxu0 0
      %1935 = vmatprep.subr.bf16.mxu0 0
      %1936 = vmatpush1.bf16.msra.mxu0 0
      %1937 = vmatprep.subr.bf16.mxu0 0
      %1938 = vmatpush1.bf16.msra.mxu0 0
      %1939 = vmatprep.subr.bf16.mxu0 0
      %1940 = vmatpush1.bf16.msra.mxu0 0
      %1941 = vmatprep.subr.bf16.mxu0 0
      %1942 = vmatpush1.bf16.msra.mxu0 0
      %1943 = vmatprep.subr.bf16.mxu0 0
      %1944 = vmatpush1.bf16.msra.mxu0 0
      %1945 = vmatprep.subr.bf16.mxu0 0
      %1946 = vmatpush1.bf16.msra.mxu0 0
      %1947 = vmatprep.subr.bf16.mxu0 0
      %1948 = vmatpush1.bf16.msra.mxu0 0
      %1949 = vmatprep.mubr.bf16.mxu0 0
      %1950 = vmatmul.mubr.bf16.gmra.mrb[0].mxu0 %v1912
      %v1951 = vpop.f32.mrb[0].mxu0
      %v1952 = vadd.f32 %v1887, %v1951
      %v1953 = vpop.f32.mrb[0].mxu0
      %v1954 = vpop.f32.mrb[0].mxu0
      %v1955 = vadd.f32 %v1891, %v1954
      %v1956 = vpop.f32.mrb[0].mxu0
      %1957 = vmatprep.mubr.bf16.mxu0 0
      %1958 = vmatmul.mubr.bf16.gmra.mrb[0].mxu0 %v1915
      %v1959 = vpop.f32.mrb[0].mxu0
      %v1960 = vadd.f32 %v1895, %v1959
      %v1961 = vpop.f32.mrb[0].mxu0
      %v1962 = vpop.f32.mrb[0].mxu0
      %v1963 = vadd.f32 %v1899, %v1962
      %v1964 = vpop.f32.mrb[0].mxu0
      %1965 = vdwg.mxu0
      %s1966 = scalar_lea.vmem %s4, 32
      %v1967 = vld [vmem:[%s1966] sm:$0xf]
      %v1968 = vld [vmem:[%s1966 + $0x4] sm:$0xf]
      %v1969 = vld [vmem:[%s1966 + $0x8] sm:$0xf]
      %v1970 = vld [vmem:[%s1966 + $0xc] sm:$0xf]
      %1971 = vset.pattern.permute.xlu0 10
      %1972 = vperm.xlu0 %1971, %v647
      %v1973 = vpop.permute.xlu0 %1972
      %1975 = vset.pattern.permute.xlu0 10
      %1976 = vperm.xlu0 %1975, %v648
      %v1977 = vpop.permute.xlu0 %1976
      %1979 = vset.pattern.permute.xlu0 10
      %1980 = vperm.xlu0 %1979, %v649
      %v1981 = vpop.permute.xlu0 %1980
      %1983 = vset.pattern.permute.xlu0 10
      %1984 = vperm.xlu0 %1983, %v650
      %v1985 = vpop.permute.xlu0 %1984
      %v1991 = vunpack.c.l.b16 %v1967
      %v1992 = vunpack.c.l.b16 %v1968
      %v1993 = vunpack.c.l.b16 %v1969
      %v1994 = vunpack.c.l.b16 %v1970
      %v1995 = vpack.c.b16 %v1992, %v1991
      %v1996 = vpack.c.b16 %v1994, %v1993
      %v1998 = vsel %vm859, %v1995, 0
      %v2001 = vsel %vm859, %v1996, 0
      %2003 = vmatprep.subr.bf16.mxu0 0
      %2004 = vmatpush1.bf16.msra.mxu0 %v311
      %2005 = vmatprep.subr.bf16.mxu0 0
      %2006 = vmatpush1.bf16.msra.mxu0 %v312
      %2007 = vmatprep.subr.bf16.mxu0 0
      %2008 = vmatpush1.bf16.msra.mxu0 0
      %2009 = vmatprep.subr.bf16.mxu0 0
      %2010 = vmatpush1.bf16.msra.mxu0 0
      %2011 = vmatprep.subr.bf16.mxu0 0
      %2012 = vmatpush1.bf16.msra.mxu0 0
      %2013 = vmatprep.subr.bf16.mxu0 0
      %2014 = vmatpush1.bf16.msra.mxu0 0
      %2015 = vmatprep.subr.bf16.mxu0 0
      %2016 = vmatpush1.bf16.msra.mxu0 0
      %2017 = vmatprep.subr.bf16.mxu0 0
      %2018 = vmatpush1.bf16.msra.mxu0 0
      %2019 = vmatprep.subr.bf16.mxu0 0
      %2020 = vmatpush1.bf16.msra.mxu0 0
      %2021 = vmatprep.subr.bf16.mxu0 0
      %2022 = vmatpush1.bf16.msra.mxu0 0
      %2023 = vmatprep.subr.bf16.mxu0 0
      %2024 = vmatpush1.bf16.msra.mxu0 0
      %2025 = vmatprep.subr.bf16.mxu0 0
      %2026 = vmatpush1.bf16.msra.mxu0 0
      %2027 = vmatprep.subr.bf16.mxu0 0
      %2028 = vmatpush1.bf16.msra.mxu0 0
      %2029 = vmatprep.subr.bf16.mxu0 0
      %2030 = vmatpush1.bf16.msra.mxu0 0
      %2031 = vmatprep.subr.bf16.mxu0 0
      %2032 = vmatpush1.bf16.msra.mxu0 0
      %2033 = vmatprep.subr.bf16.mxu0 0
      %2034 = vmatpush1.bf16.msra.mxu0 0
      %2035 = vmatprep.mubr.bf16.mxu0 0
      %2036 = vmatmul.mubr.bf16.gmra.mrb[0].mxu0 %v1998
      %v2037 = vpop.f32.mrb[0].mxu0
      %v2038 = vadd.f32 %v1973, %v2037
      %v2039 = vpop.f32.mrb[0].mxu0
      %v2040 = vpop.f32.mrb[0].mxu0
      %v2041 = vadd.f32 %v1977, %v2040
      %v2042 = vpop.f32.mrb[0].mxu0
      %2043 = vmatprep.mubr.bf16.mxu0 0
      %2044 = vmatmul.mubr.bf16.gmra.mrb[0].mxu0 %v2001
      %v2045 = vpop.f32.mrb[0].mxu0
      %v2046 = vadd.f32 %v1981, %v2045
      %v2047 = vpop.f32.mrb[0].mxu0
      %v2048 = vpop.f32.mrb[0].mxu0
      %v2049 = vadd.f32 %v1985, %v2048
      %v2050 = vpop.f32.mrb[0].mxu0
      %2051 = vdwg.mxu0
      %v2052 = vpack.c.bf16 %v2041, %v2038
      %v2053 = vpack.c.bf16 %v2049, %v2046
      %v2055 = vsel %vm345, %v2052, 0
      %v2058 = vsel %vm345, %v2053, 0
      %2060 = vmatprep.subr.bf16.mxu0 0
      %2061 = vmatpush1.bf16.xpose.msra.mxu0 %v2055
      %2062 = vmatprep.subr.bf16.mxu0 0
      %2063 = vmatpush1.bf16.xpose.msra.mxu0 %v2058
      %2064 = vmatprep.subr.bf16.mxu0 0
      %2065 = vmatpush1.bf16.xpose.msra.mxu0 0
      %2066 = vmatprep.subr.bf16.mxu0 0
      %2067 = vmatpush1.bf16.xpose.msra.mxu0 0
      %2068 = vmatprep.subr.bf16.mxu0 0
      %2069 = vmatpush1.bf16.xpose.msra.mxu0 0
      %2070 = vmatprep.subr.bf16.mxu0 0
      %2071 = vmatpush1.bf16.xpose.msra.mxu0 0
      %2072 = vmatprep.subr.bf16.mxu0 0
      %2073 = vmatpush1.bf16.xpose.msra.mxu0 0
      %2074 = vmatprep.subr.bf16.mxu0 0
      %2075 = vmatpush1.bf16.xpose.msra.mxu0 0
      %2076 = vmatprep.subr.bf16.mxu0 0
      %2077 = vmatpush1.bf16.xpose.msra.mxu0 0
      %2078 = vmatprep.subr.bf16.mxu0 0
      %2079 = vmatpush1.bf16.xpose.msra.mxu0 0
      %2080 = vmatprep.subr.bf16.mxu0 0
      %2081 = vmatpush1.bf16.xpose.msra.mxu0 0
      %2082 = vmatprep.subr.bf16.mxu0 0
      %2083 = vmatpush1.bf16.xpose.msra.mxu0 0
      %2084 = vmatprep.subr.bf16.mxu0 0
      %2085 = vmatpush1.bf16.xpose.msra.mxu0 0
      %2086 = vmatprep.subr.bf16.mxu0 0
      %2087 = vmatpush1.bf16.xpose.msra.mxu0 0
      %2088 = vmatprep.subr.bf16.mxu0 0
      %2089 = vmatpush1.bf16.xpose.msra.mxu0 0
      %2090 = vmatprep.subr.bf16.mxu0 0
      %2091 = vmatpush1.bf16.xpose.msra.mxu0 0
      %2092 = vmatprep.mubr.bf16.mxu0 0
      %2093 = vmatmul.mubr.bf16.gmra.mrb[0].mxu0 %v2055
      %v2094 = vpop.f32.mrb[0].mxu0
      %v2095 = vadd.f32 0.0, %v2094
      %v2096 = vpop.f32.mrb[0].mxu0
      %v2097 = vpop.f32.mrb[0].mxu0
      %v2098 = vadd.f32 0.0, %v2097
      %v2099 = vpop.f32.mrb[0].mxu0
      %2100 = vmatprep.mubr.bf16.mxu0 0
      %2101 = vmatmul.mubr.bf16.gmra.mrb[0].mxu0 %v2058
      %v2102 = vpop.f32.mrb[0].mxu0
      %v2103 = vadd.f32 0.0, %v2102
      %v2104 = vpop.f32.mrb[0].mxu0
      %v2105 = vpop.f32.mrb[0].mxu0
      %v2106 = vadd.f32 0.0, %v2105
      %v2107 = vpop.f32.mrb[0].mxu0
      %2108 = vdwg.mxu0
      %v2109 = vmul.f32 %v2095, 0.125
      %v2110 = vmul.f32 %v2098, 0.125
      %v2111 = vmul.f32 %v2103, 0.125
      %v2112 = vmul.f32 %v2106, 0.125
      %v2113 = vsel %vm859, %v2109, -inf
      %2114 = vmax.xlane.f32.xlu0 %v2113
      %v2115 = vpop.xlane.xlu0 %2114
      %v2116 = vsel %vm859, %v2110, -inf
      %2117 = vmax.xlane.f32.xlu0 %v2116
      %v2118 = vpop.xlane.xlu0 %2117
      %v2119 = vsel %vm859, %v2111, -inf
      %2120 = vmax.xlane.f32.xlu0 %v2119
      %v2121 = vpop.xlane.xlu0 %2120
      %v2122 = vsel %vm859, %v2112, -inf
      %2123 = vmax.xlane.f32.xlu0 %v2122
      %v2124 = vpop.xlane.xlu0 %2123
      %v2125 = vsub.f32 %v2109, %v2115
      %v2126 = vsub.f32 %v2110, %v2118
      %v2127 = vsub.f32 %v2111, %v2121
      %v2128 = vsub.f32 %v2112, %v2124
      %v2129 = vmul.f32 %v2125, 1.442695
      %v2130 = vpow.pop %v2129
      %v2131 = vmul.f32 %v2126, 1.442695
      %v2132 = vpow.pop %v2131
      %v2133 = vmul.f32 %v2127, 1.442695
      %v2134 = vpow.pop %v2133
      %v2135 = vmul.f32 %v2128, 1.442695
      %v2136 = vpow.pop %v2135
      %v2137 = vsel %vm859, %v2130, 0.0
      %2138 = vadd.xlane.f32.xlu0 %v2137
      %v2139 = vpop.xlane.xlu0 %2138
      %v2140 = vsel %vm859, %v2132, 0.0
      %2141 = vadd.xlane.f32.xlu0 %v2140
      %v2142 = vpop.xlane.xlu0 %2141
      %v2143 = vsel %vm859, %v2134, 0.0
      %2144 = vadd.xlane.f32.xlu0 %v2143
      %v2145 = vpop.xlane.xlu0 %2144
      %v2146 = vsel %vm859, %v2136, 0.0
      %2147 = vadd.xlane.f32.xlu0 %v2146
      %v2148 = vpop.xlane.xlu0 %2147
      %v2149 = vrcp.pop %v2139
      %v2150 = vrcp.pop %v2142
      %v2151 = vrcp.pop %v2145
      %v2152 = vrcp.pop %v2148
      %v2153 = vmul.f32 %v2130, %v2149
      %v2154 = vmul.f32 %v2132, %v2150
      %v2155 = vmul.f32 %v2134, %v2151
      %v2156 = vmul.f32 %v2136, %v2152
      %v2157 = vpack.c.bf16 %v2154, %v2153
      %v2158 = vpack.c.bf16 %v2156, %v2155
      %v2160 = vsel %vm859, %v2157, 0
      %v2163 = vsel %vm859, %v2158, 0
      %2165 = vmatprep.subr.bf16.mxu0 0
      %2166 = vmatpush1.bf16.msra.mxu0 %v2052
      %2167 = vmatprep.subr.bf16.mxu0 0
      %2168 = vmatpush1.bf16.msra.mxu0 %v2053
      %2169 = vmatprep.subr.bf16.mxu0 0
      %2170 = vmatpush1.bf16.msra.mxu0 0
      %2171 = vmatprep.subr.bf16.mxu0 0
      %2172 = vmatpush1.bf16.msra.mxu0 0
      %2173 = vmatprep.subr.bf16.mxu0 0
      %2174 = vmatpush1.bf16.msra.mxu0 0
      %2175 = vmatprep.subr.bf16.mxu0 0
      %2176 = vmatpush1.bf16.msra.mxu0 0
      %2177 = vmatprep.subr.bf16.mxu0 0
      %2178 = vmatpush1.bf16.msra.mxu0 0
      %2179 = vmatprep.subr.bf16.mxu0 0
      %2180 = vmatpush1.bf16.msra.mxu0 0
      %2181 = vmatprep.subr.bf16.mxu0 0
      %2182 = vmatpush1.bf16.msra.mxu0 0
      %2183 = vmatprep.subr.bf16.mxu0 0
      %2184 = vmatpush1.bf16.msra.mxu0 0
      %2185 = vmatprep.subr.bf16.mxu0 0
      %2186 = vmatpush1.bf16.msra.mxu0 0
      %2187 = vmatprep.subr.bf16.mxu0 0
      %2188 = vmatpush1.bf16.msra.mxu0 0
      %2189 = vmatprep.subr.bf16.mxu0 0
      %2190 = vmatpush1.bf16.msra.mxu0 0
      %2191 = vmatprep.subr.bf16.mxu0 0
      %2192 = vmatpush1.bf16.msra.mxu0 0
      %2193 = vmatprep.subr.bf16.mxu0 0
      %2194 = vmatpush1.bf16.msra.mxu0 0
      %2195 = vmatprep.subr.bf16.mxu0 0
      %2196 = vmatpush1.bf16.msra.mxu0 0
      %2197 = vmatprep.mubr.bf16.mxu0 0
      %2198 = vmatmul.mubr.bf16.gmra.mrb[0].mxu0 %v2160
      %v2199 = vpop.f32.mrb[0].mxu0
      %v2200 = vadd.f32 0.0, %v2199
      %v2201 = vpop.f32.mrb[0].mxu0
      %v2202 = vpop.f32.mrb[0].mxu0
      %v2203 = vadd.f32 0.0, %v2202
      %v2204 = vpop.f32.mrb[0].mxu0
      %2205 = vmatprep.mubr.bf16.mxu0 0
      %2206 = vmatmul.mubr.bf16.gmra.mrb[0].mxu0 %v2163
      %v2207 = vpop.f32.mrb[0].mxu0
      %v2208 = vadd.f32 0.0, %v2207
      %v2209 = vpop.f32.mrb[0].mxu0
      %v2210 = vpop.f32.mrb[0].mxu0
      %v2211 = vadd.f32 0.0, %v2210
      %v2212 = vpop.f32.mrb[0].mxu0
      %2213 = vdwg.mxu0
      %v2214 = vpack.c.bf16 %v2203, %v2200
      %v2215 = vpack.c.bf16 %v2211, %v2208
      %v2216 = vld [vmem:[%s5] sm:$0xf]
      %v2217 = vld [vmem:[%s5 + $0x4] sm:$0xf]
      %v2218 = vld [vmem:[%s5 + $0x8] sm:$0xf]
      %v2219 = vld [vmem:[%s5 + $0xc] sm:$0xf]
      %v2220 = vld [vmem:[%s5 + $0x10] sm:$0xf]
      %v2221 = vld [vmem:[%s5 + $0x14] sm:$0xf]
      %v2222 = vld [vmem:[%s5 + $0x18] sm:$0xf]
      %v2223 = vld [vmem:[%s5 + $0x1c] sm:$0xf]
      %v2224 = vld [vmem:[%s7] sm:$0x1]
      %v2226 = vlaneseq
      %v2227 = vshrl.u32 %v2226, 7
      %v2228 = vsub.s32 0, %v2227
      %v2229 = vrot.slane %v2224, %v2228
      %v2239 = vunpack.c.l.b16 %v2216
      %v2240 = vunpack.c.l.b16 %v2217
      %v2241 = vunpack.c.l.b16 %v2218
      %v2242 = vunpack.c.l.b16 %v2219
      %v2243 = vunpack.c.l.b16 %v2220
      %v2244 = vunpack.c.l.b16 %v2221
      %v2245 = vunpack.c.l.b16 %v2222
      %v2246 = vunpack.c.l.b16 %v2223
      %v2247 = vpack.c.b16 %v2240, %v2239
      %v2248 = vpack.c.b16 %v2242, %v2241
      %v2249 = vpack.c.b16 %v2244, %v2243
      %v2250 = vpack.c.b16 %v2246, %v2245
      %v2256 = vsel %vm345, %v2214, 0
      %v2259 = vsel %vm345, %v2215, 0
      %2261 = vmatprep.subr.bf16.mxu0 0
      %2262 = vmatpush1.bf16.msra.mxu0 %v2247
      %2263 = vmatprep.subr.bf16.mxu0 0
      %2264 = vmatpush1.bf16.msra.mxu0 %v2248
      %2265 = vmatprep.subr.bf16.mxu0 0
      %2266 = vmatpush1.bf16.msra.mxu0 %v2249
      %2267 = vmatprep.subr.bf16.mxu0 0
      %2268 = vmatpush1.bf16.msra.mxu0 %v2250
      %2269 = vmatprep.subr.bf16.mxu0 0
      %2270 = vmatpush1.bf16.msra.mxu0 0
      %2271 = vmatprep.subr.bf16.mxu0 0
      %2272 = vmatpush1.bf16.msra.mxu0 0
      %2273 = vmatprep.subr.bf16.mxu0 0
      %2274 = vmatpush1.bf16.msra.mxu0 0
      %2275 = vmatprep.subr.bf16.mxu0 0
      %2276 = vmatpush1.bf16.msra.mxu0 0
      %2277 = vmatprep.subr.bf16.mxu0 0
      %2278 = vmatpush1.bf16.msra.mxu0 0
      %2279 = vmatprep.subr.bf16.mxu0 0
      %2280 = vmatpush1.bf16.msra.mxu0 0
      %2281 = vmatprep.subr.bf16.mxu0 0
      %2282 = vmatpush1.bf16.msra.mxu0 0
      %2283 = vmatprep.subr.bf16.mxu0 0
      %2284 = vmatpush1.bf16.msra.mxu0 0
      %2285 = vmatprep.subr.bf16.mxu0 0
      %2286 = vmatpush1.bf16.msra.mxu0 0
      %2287 = vmatprep.subr.bf16.mxu0 0
      %2288 = vmatpush1.bf16.msra.mxu0 0
      %2289 = vmatprep.subr.bf16.mxu0 0
      %2290 = vmatpush1.bf16.msra.mxu0 0
      %2291 = vmatprep.subr.bf16.mxu0 0
      %2292 = vmatpush1.bf16.msra.mxu0 0
      %2293 = vmatprep.mubr.bf16.mxu0 0
      %2294 = vmatmul.mubr.bf16.gmra.mrb[0].mxu0 %v2256
      %v2295 = vpop.f32.mrb[0].mxu0
      %v2296 = vadd.f32 %v2229, %v2295
      %v2297 = vpop.f32.mrb[0].mxu0
      %v2298 = vpop.f32.mrb[0].mxu0
      %v2299 = vadd.f32 %v2229, %v2298
      %v2300 = vpop.f32.mrb[0].mxu0
      %2301 = vmatprep.mubr.bf16.mxu0 0
      %2302 = vmatmul.mubr.bf16.gmra.mrb[0].mxu0 %v2259
      %v2303 = vpop.f32.mrb[0].mxu0
      %v2304 = vadd.f32 %v2229, %v2303
      %v2305 = vpop.f32.mrb[0].mxu0
      %v2306 = vpop.f32.mrb[0].mxu0
      %v2307 = vadd.f32 %v2229, %v2306
      %v2308 = vpop.f32.mrb[0].mxu0
      %2309 = vdwg.mxu0
      %v2310 = vadd.f32 %v1308, %v1952
      %v2311 = vadd.f32 %v1311, %v1955
      %v2312 = vadd.f32 %v1316, %v1960
      %v2313 = vadd.f32 %v1319, %v1963
      %v2314 = vadd.f32 %v2310, %v2296
      %v2315 = vadd.f32 %v2311, %v2299
      %v2316 = vadd.f32 %v2312, %v2304
      %v2317 = vadd.f32 %v2313, %v2307
      %v2318 = vmul.f32 %v307, 3.0
      %v2319 = vmul.f32 %v308, 3.0
      %v2320 = vmul.f32 %v309, 3.0
      %v2321 = vmul.f32 %v310, 3.0
      %v2322 = vadd.f32 %v2314, %v2318
      %v2323 = vadd.f32 %v2315, %v2319
      %v2324 = vadd.f32 %v2316, %v2320
      %v2325 = vadd.f32 %v2317, %v2321
      %s2326 = scalar_lea.vmem %s4, 48
      %v2327 = vld [vmem:[%s2326] sm:$0xf]
      %v2328 = vld [vmem:[%s2326 + $0x4] sm:$0xf]
      %v2329 = vld [vmem:[%s2326 + $0x8] sm:$0xf]
      %v2330 = vld [vmem:[%s2326 + $0xc] sm:$0xf]
      %v2331 = vpack.c.bf16 %v2323, %v2322
      %v2332 = vpack.c.bf16 %v2325, %v2324
      %2333 = vset.pattern.permute.xlu0 11
      %2334 = vperm.xlu0 %2333, %v647
      %v2335 = vpop.permute.xlu0 %2334
      %2337 = vset.pattern.permute.xlu0 11
      %2338 = vperm.xlu0 %2337, %v648
      %v2339 = vpop.permute.xlu0 %2338
      %2341 = vset.pattern.permute.xlu0 11
      %2342 = vperm.xlu0 %2341, %v649
      %v2343 = vpop.permute.xlu0 %2342
      %2345 = vset.pattern.permute.xlu0 11
      %2346 = vperm.xlu0 %2345, %v650
      %v2347 = vpop.permute.xlu0 %2346
      %v2353 = vunpack.c.l.b16 %v2327
      %v2354 = vunpack.c.l.b16 %v2328
      %v2355 = vunpack.c.l.b16 %v2329
      %v2356 = vunpack.c.l.b16 %v2330
      %v2357 = vpack.c.b16 %v2354, %v2353
      %v2358 = vpack.c.b16 %v2356, %v2355
      %v2360 = vsel %vm859, %v2357, 0
      %v2363 = vsel %vm859, %v2358, 0
      %2365 = vmatprep.subr.bf16.mxu0 0
      %2366 = vmatpush1.bf16.msra.mxu0 %v2331
      %2367 = vmatprep.subr.bf16.mxu0 0
      %2368 = vmatpush1.bf16.msra.mxu0 %v2332
      %2369 = vmatprep.subr.bf16.mxu0 0
      %2370 = vmatpush1.bf16.msra.mxu0 0
      %2371 = vmatprep.subr.bf16.mxu0 0
      %2372 = vmatpush1.bf16.msra.mxu0 0
      %2373 = vmatprep.subr.bf16.mxu0 0
      %2374 = vmatpush1.bf16.msra.mxu0 0
      %2375 = vmatprep.subr.bf16.mxu0 0
      %2376 = vmatpush1.bf16.msra.mxu0 0
      %2377 = vmatprep.subr.bf16.mxu0 0
      %2378 = vmatpush1.bf16.msra.mxu0 0
      %2379 = vmatprep.subr.bf16.mxu0 0
      %2380 = vmatpush1.bf16.msra.mxu0 0
      %2381 = vmatprep.subr.bf16.mxu0 0
      %2382 = vmatpush1.bf16.msra.mxu0 0
      %2383 = vmatprep.subr.bf16.mxu0 0
      %2384 = vmatpush1.bf16.msra.mxu0 0
      %2385 = vmatprep.subr.bf16.mxu0 0
      %2386 = vmatpush1.bf16.msra.mxu0 0
      %2387 = vmatprep.subr.bf16.mxu0 0
      %2388 = vmatpush1.bf16.msra.mxu0 0
      %2389 = vmatprep.subr.bf16.mxu0 0
      %2390 = vmatpush1.bf16.msra.mxu0 0
      %2391 = vmatprep.subr.bf16.mxu0 0
      %2392 = vmatpush1.bf16.msra.mxu0 0
      %2393 = vmatprep.subr.bf16.mxu0 0
      %2394 = vmatpush1.bf16.msra.mxu0 0
      %2395 = vmatprep.subr.bf16.mxu0 0
      %2396 = vmatpush1.bf16.msra.mxu0 0
      %2397 = vmatprep.mubr.bf16.mxu0 0
      %2398 = vmatmul.mubr.bf16.gmra.mrb[0].mxu0 %v2360
      %v2399 = vpop.f32.mrb[0].mxu0
      %v2400 = vadd.f32 %v2335, %v2399
      %v2401 = vpop.f32.mrb[0].mxu0
      %v2402 = vpop.f32.mrb[0].mxu0
      %v2403 = vadd.f32 %v2339, %v2402
      %v2404 = vpop.f32.mrb[0].mxu0
      %2405 = vmatprep.mubr.bf16.mxu0 0
      %2406 = vmatmul.mubr.bf16.gmra.mrb[0].mxu0 %v2363
      %v2407 = vpop.f32.mrb[0].mxu0
      %v2408 = vadd.f32 %v2343, %v2407
      %v2409 = vpop.f32.mrb[0].mxu0
      %v2410 = vpop.f32.mrb[0].mxu0
      %v2411 = vadd.f32 %v2347, %v2410
      %v2412 = vpop.f32.mrb[0].mxu0
      %2413 = vdwg.mxu0
      %v2414 = vadd.f32 %v2400, %v307
      %v2415 = vadd.f32 %v2403, %v308
      %v2416 = vadd.f32 %v2408, %v309
      %v2417 = vadd.f32 %v2411, %v310
      %2418 = vst.msk [vmem:[%s305] sm:$0xff] %vm345, %v2414
      %2419 = vst.msk [vmem:[%s305 + $0x8] sm:$0xff] %vm345, %v2415
      %2420 = vst.msk [vmem:[%s305 + $0x10] sm:$0xff] %vm345, %v2416
      %2421 = vst.msk [vmem:[%s305 + $0x18] sm:$0xff] %vm345, %v2417
      %p2422 = scmp.lt.s32.totalorder %s19, 1
      %s2423 = scalar_select %p2422, %s19, 1
      %s2424 = smul.addr %s2423, 4
      %s2425 = smul.addr %s2424, 8
      %s2426 = scalar_lea.vmem %s8, %s2425
      // Predicated region
      $region53: #{ssam_forward.1} parent=51 // pred_check
        %p2427 = pneg %p210
      $region54: #{ssam_forward.1} parent=51 // pred_check_branch
        %2429 = sbr.rel (%p2427) target = $region56
      $region55: #{ssam_forward.1} parent=51 // pred_region
        _
      $region56: #{ssam_forward.1} parent=51 // pred_fallthru
        _
    $region52: #{ssam_forward.1} parent=5 // pred_fallthru
      _
    %p2430 = scmp.le.s32.totalorder 2, %s14
    // Predicated region
    $region57: #{ssam_forward.1} parent=5 // pred_check
      %p2431 = pneg %p2430
    $region58: #{ssam_forward.1} parent=5 // pred_check_branch
      %2433 = sbr.rel (%p2431) target = $region60
    $region59: #{ssam_forward.1} parent=5 // pred_region
      %s2434 = ssub.s32 %s14, 2
      // Predicated region
      $region61: #{ssam_forward.1} parent=59 // pred_check
        %p2435 = pneg %p216
      $region62: #{ssam_forward.1} parent=59 // pred_check_branch
        %2437 = sbr.rel (%p2435) target = $region64
      $region63: #{ssam_forward.1} parent=59 // pred_region
        %p2438 = scmp.lt.s32.totalorder %s20, 1
        %s2439 = scalar_select %p2438, %s20, 1
        %s2440 = smul.addr %s2439, 4
        %s2441 = smul.addr %s2440, 8
        %s2442 = scalar_lea.vmem %s8, %s2441
      $region64: #{ssam_forward.1} parent=59 // pred_fallthru
        _
    $region60: #{ssam_forward.1} parent=5 // pred_fallthru
      _
  $region6: #{ssam_forward.1} parent=0 // loop_footer
    %s18 = sadd.s32 1, %s14
  $region7: #{ssam_forward.1} parent=0 // loop_footer_branch
    %13 = sbr.rel target = $region3
  $region8: #{ssam_forward.1} parent=0 // loop_exit
    _

</llo_original>
